<compile_context>
chip_gen: v5e
topology: v5e:2x2
jax: 0.10.0
libtpu: 0.0.40
codegen_flags: <defaults>
</compile_context>

<pallas_src>
import jax
import jax.numpy as jnp
from jax import lax
from jax.experimental import pallas as pl
from jax.experimental.pallas import tpu as pltpu


# ----------------------------------------------------------------------------
# Pallas kernel: one GRU layer, both directions stacked on the batch axis,
# whole sequence.  Inputs:
#   ig_ref   (S, D*B, 3H)  precomputed input gates  x@W_i3 + (b_i + b_h[r,z])
#   m_ref    (S, D*B, 1)   validity mask (0/1 float), dir-1 rows pre-reversed
#   wh_ref   (D, H, 3H)    fused hidden weights [W_hr|W_hz|W_hn]^T
#   bhn_ref  (D, 1, H)     hidden bias of the n-gate (must stay un-fused)
# Outputs:
#   out_ref   (S, D*B, H)  per-step hidden (0 past length)
#   hlast_ref (D*B, H)     final hidden per direction
# ----------------------------------------------------------------------------
def gru_fused_kernel(ig_ref, m_ref, wh_ref, bhn_ref, out_ref, hlast_ref):
    S, DB, H = out_ref.shape
    D = wh_ref.shape[0]
    B = DB // D

    # Hoist loop-invariant weight/bias loads out of the recurrence.
    wh = [wh_ref[d] for d in range(D)]      # each (H, 3H)
    bhn = [bhn_ref[d] for d in range(D)]    # each (1, H)

    def step(t, hs):
        ig_t = ig_ref[t]                    # (D*B, 3H)
        valid_t = m_ref[t] > 0.0            # (D*B, 1) bool
        new_hs = []
        outs = []
        for d in range(D):
            h_d = hs[d]                                   # (B, H)
            ig_d = ig_t[d * B:(d + 1) * B]                # (B, 3H)
            m_d = valid_t[d * B:(d + 1) * B]              # (B, 1)
            # Single fused hidden-side matmul per direction per step.
            hg = jnp.dot(h_d, wh[d], preferred_element_type=jnp.float32)
            r = jax.nn.sigmoid(ig_d[:, :H] + hg[:, :H])
            z = jax.nn.sigmoid(ig_d[:, H:2 * H] + hg[:, H:2 * H])
            n = jnp.tanh(ig_d[:, 2 * H:] + r * (hg[:, 2 * H:] + bhn[d]))
            h_new = (1.0 - z) * n + z * h_d
            # packed-sequence semantics: freeze hidden & emit 0 past the length
            h_next = jnp.where(m_d, h_new, h_d)
            outs.append(jnp.where(m_d, h_next, 0.0))
            new_hs.append(h_next)
        out_ref[t] = jnp.concatenate(outs, axis=0)        # one store per step
        return tuple(new_hs)

    h0 = tuple(jnp.zeros((B, H), jnp.float32) for _ in range(D))
    hs = lax.fori_loop(0, S, step, h0, unroll=True)
    hlast_ref[...] = jnp.concatenate(list(hs), axis=0)


def gru_layer_stacked(igates, mask_stacked, w_h3, b_hn):
    """Run one GRU layer (all directions stacked on batch) in one pallas_call."""
    S, DB, G = igates.shape
    D, H, _ = w_h3.shape
    vmem = lambda: pl.BlockSpec(memory_space=pltpu.MemorySpace.VMEM)
    out, h_last = pl.pallas_call(
        gru_fused_kernel,
        out_shape=(jax.ShapeDtypeStruct((S, DB, H), jnp.float32),
                   jax.ShapeDtypeStruct((DB, H), jnp.float32)),
        in_specs=[vmem() for _ in range(4)],
        out_specs=(vmem(), vmem()),
    )(igates, mask_stacked, w_h3, b_hn)
    return out, h_last


# ----------------------------------------------------------------------------
# Parameter init (deterministic, mirrors init_weights: xavier weights, 0 bias)
# ----------------------------------------------------------------------------
def xavier_uniform(key, shape):
    fan_out, fan_in = shape
    bound = jnp.sqrt(6.0 / (fan_in + fan_out))
    return jax.random.uniform(key, shape, jnp.float32, -bound, bound)


def init_params(key, cfg):
    num_dirs = 2 if cfg["bidirectional"] else 1
    H = cfg["n_feature_dim"]
    keys = jax.random.split(key, 1 + 2 * cfg["n_rnn_layers"] * num_dirs)
    params = {"embed": xavier_uniform(keys[0], (cfg["vocab_size"], cfg["n_embed"]))}
    rnn = {}
    ki = 1
    for l in range(cfg["n_rnn_layers"]):
        in_dim = cfg["n_embed"] if l == 0 else H * num_dirs
        w_i3, w_h3, b_i3, b_hn = [], [], [], []
        for _d in range(num_dirs):
            w_ih = xavier_uniform(keys[ki], (3 * H, in_dim)); ki += 1  # (3H, in) rows [r|z|n]
            w_hh = xavier_uniform(keys[ki], (3 * H, H)); ki += 1       # (3H, H)
            b_ih = jnp.zeros((3 * H,), jnp.float32)                    # PyTorch b_ih (zero init)
            b_hh = jnp.zeros((3 * H,), jnp.float32)                    # PyTorch b_hh (zero init)
            w_i3.append(w_ih.T)                                        # (in, 3H), cols [r|z|n]
            w_h3.append(w_hh.T)                                        # (H, 3H)
            # fold b_ir+b_hr and b_iz+b_hz into the precomputed input gates;
            # b_in rides along; b_hn must stay separate (gated by r).
            b_i3.append(jnp.concatenate([
                (b_ih[0 * H:1 * H] + b_hh[0 * H:1 * H]),
                (b_ih[1 * H:2 * H] + b_hh[1 * H:2 * H]),
                b_ih[2 * H:3 * H]])[None, :])                          # (1, 3H)
            b_hn.append(b_hh[2 * H:3 * H][None, :])                    # (1, H)
        rnn[l] = {
            "w_i3": jnp.stack(w_i3, 0),   # (D, in, 3H)
            "w_h3": jnp.stack(w_h3, 0),   # (D, H, 3H)
            "b_i3": jnp.stack(b_i3, 0),   # (D, 1, 3H)
            "b_hn": jnp.stack(b_hn, 0),   # (D, 1, H)
        }
    params["rnn"] = rnn
    return params


# ----------------------------------------------------------------------------
# TextEncoder forward
# ----------------------------------------------------------------------------
def text_encoder_forward(params, cfg, input_inds, input_masks):
    B, S = input_inds.shape
    H = cfg["n_feature_dim"]
    D = 2 if cfg["bidirectional"] else 1

    # lengths = sum(mask).clamp(min=1); effective mask = t < length
    lengths = jnp.maximum(jnp.sum(input_masks, axis=-1), 1.0).astype(jnp.int32)  # (B,)
    eff_mask = (jnp.arange(S)[None, :] < lengths[:, None]).astype(jnp.float32)   # (B, S)
    mask_sb = eff_mask.T[:, :, None]                                             # (S, B, 1)
    if D == 2:
        mask_stacked = jnp.concatenate([mask_sb, mask_sb[::-1]], axis=1)         # (S, 2B, 1)
    else:
        mask_stacked = mask_sb

    # TODO(synk): embedding gather stays in plain JAX (data-dependent gather).
    x = params["embed"][input_inds]                   # (B, S, E)
    layer_in = jnp.transpose(x, (1, 0, 2))            # (S, B, E) time-major

    hiddens = []
    for l in range(cfg["n_rnn_layers"]):
        p = params["rnn"][l]
        if D == 2:
            # dir 0 = forward (time order), dir 1 = backward (time-reversed)
            x_dir = jnp.stack([layer_in, layer_in[::-1]], axis=1)     # (S, D, B, Ein)
        else:
            x_dir = layer_in[:, None]
        # Hoisted input projections: one batched matmul over all steps/directions.
        igates = jnp.einsum("sdbe,deg->sdbg", x_dir, p["w_i3"],
                            preferred_element_type=jnp.float32) + p["b_i3"][None]
        igates = igates.reshape(S, D * B, 3 * H)

        out, h_last = gru_layer_stacked(igates, mask_stacked, p["w_h3"], p["b_hn"])
        out = out.reshape(S, D, B, H)

        for d in range(D):
            hiddens.append(h_last[d * B:(d + 1) * B])                 # (B, H)

        if D == 2:
            fwd = out[:, 0]
            bwd = out[:, 1][::-1]                                     # un-reverse time
            layer_in = jnp.concatenate([fwd, bwd], axis=-1)           # (S, B, 2H)
        else:
            layer_in = out[:, 0]

    if cfg["bidirectional"]:
        feat_seq_sb = (layer_in[..., :H] + layer_in[..., H:]) * 0.5
    else:
        feat_seq_sb = layer_in
    feat_seq = jnp.transpose(feat_seq_sb, (1, 0, 2))                  # (B, S, H)

    # last_feat = feat_seq[b, lengths[b]-1, :]
    idx = jnp.broadcast_to((lengths - 1)[:, None, None], (B, 1, H))
    last_feat = jnp.take_along_axis(feat_seq, idx, axis=1)[:, 0, :]   # (B, H)

    hidden = jnp.stack(hiddens, axis=0)                               # (L*D, B, H)
    return feat_seq, last_feat, hidden


# ----------------------------------------------------------------------------
if __name__ == "__main__":
    cfg = dict(vocab_size=64, n_embed=32, n_feature_dim=32,
               n_rnn_layers=2, bidirectional=True)

    key = jax.random.PRNGKey(0)
    k_inds, k_params = jax.random.split(key)

    B, S = 4, 8
    input_inds = jax.random.randint(k_inds, (B, S), 0, cfg["vocab_size"], dtype=jnp.int32)
    lengths = jnp.array([8, 5, 3, 1], dtype=jnp.int32)
    input_masks = (jnp.arange(S)[None, :] < lengths[:, None]).astype(jnp.float32)

    params = init_params(k_params, cfg)

    feat_seq, last_feat, hidden = text_encoder_forward(params, cfg, input_inds, input_masks)
    jax.block_until_ready((feat_seq, last_feat, hidden))

    assert feat_seq.shape == (B, S, cfg["n_feature_dim"])
    assert last_feat.shape == (B, cfg["n_feature_dim"])
    assert hidden.shape == (cfg["n_rnn_layers"] * 2, B, cfg["n_feature_dim"])
    assert bool(jnp.all(jnp.isfinite(feat_seq)))
    assert bool(jnp.all(jnp.isfinite(last_feat)))
    assert bool(jnp.all(jnp.isfinite(hidden)))
    print("KERNEL_OK")
</pallas_src>

<mosaic_0001>
module attributes {stable_mosaic.version = 11 : i64} {
  func.func @gru_fused_kernel(%arg0: memref<8x8x96xf32, #tpu.memory_space<vmem>>, %arg1: memref<8x8x1xf32, #tpu.memory_space<vmem>>, %arg2: memref<2x32x96xf32, #tpu.memory_space<vmem>>, %arg3: memref<2x1x32xf32, #tpu.memory_space<vmem>>, %arg4: memref<8x8x32xf32, #tpu.memory_space<vmem>>, %arg5: memref<8x32xf32, #tpu.memory_space<vmem>>) attributes {dimension_semantics = [], scalar_prefetch = 0 : i64, scratch_operands = 0 : i64, tpu.core_type = #tpu.core_type<tc>} {
    %c0 = arith.constant 0 : index
    %c0_0 = arith.constant 0 : index
    %c0_1 = arith.constant 0 : index
    %0 = vector.load %arg2[%c0, %c0_0, %c0_1] : memref<2x32x96xf32, #tpu.memory_space<vmem>>, vector<1x32x96xf32>
    %1 = vector.shape_cast %0 : vector<1x32x96xf32> to vector<32x96xf32>
    %c1 = arith.constant 1 : index
    %c0_2 = arith.constant 0 : index
    %c0_3 = arith.constant 0 : index
    %2 = vector.load %arg2[%c1, %c0_2, %c0_3] : memref<2x32x96xf32, #tpu.memory_space<vmem>>, vector<1x32x96xf32>
    %3 = vector.shape_cast %2 : vector<1x32x96xf32> to vector<32x96xf32>
    %c0_4 = arith.constant 0 : index
    %c0_5 = arith.constant 0 : index
    %c0_6 = arith.constant 0 : index
    %4 = vector.load %arg3[%c0_4, %c0_5, %c0_6] : memref<2x1x32xf32, #tpu.memory_space<vmem>>, vector<1x1x32xf32>
    %5 = vector.shape_cast %4 : vector<1x1x32xf32> to vector<1x32xf32>
    %c1_7 = arith.constant 1 : index
    %c0_8 = arith.constant 0 : index
    %c0_9 = arith.constant 0 : index
    %6 = vector.load %arg3[%c1_7, %c0_8, %c0_9] : memref<2x1x32xf32, #tpu.memory_space<vmem>>, vector<1x1x32xf32>
    %7 = vector.shape_cast %6 : vector<1x1x32xf32> to vector<1x32xf32>
    %cst = arith.constant 0.000000e+00 : f32
    %8 = vector.broadcast %cst : f32 to vector<4x32xf32>
    %cst_10 = arith.constant 0.000000e+00 : f32
    %9 = vector.broadcast %cst_10 : f32 to vector<4x32xf32>
    %c0_i32 = arith.constant 0 : i32
    %10 = arith.index_cast %c0_i32 : i32 to index
    %c0_11 = arith.constant 0 : index
    %c0_12 = arith.constant 0 : index
    %11 = vector.load %arg0[%10, %c0_11, %c0_12] : memref<8x8x96xf32, #tpu.memory_space<vmem>>, vector<1x8x96xf32>
    %12 = vector.shape_cast %11 : vector<1x8x96xf32> to vector<8x96xf32>
    %13 = arith.index_cast %c0_i32 : i32 to index
    %c0_13 = arith.constant 0 : index
    %c0_14 = arith.constant 0 : index
    %14 = vector.load %arg1[%13, %c0_13, %c0_14] : memref<8x8x1xf32, #tpu.memory_space<vmem>>, vector<1x8x1xf32>
    %15 = vector.shape_cast %14 : vector<1x8x1xf32> to vector<8x1xf32>
    %cst_15 = arith.constant 0.000000e+00 : f32
    %16 = vector.broadcast %cst_15 : f32 to vector<8x1xf32>
    %17 = arith.cmpf ogt, %15, %16 : vector<8x1xf32>
    %18 = vector.extract_strided_slice %12 {offsets = [0, 0], sizes = [4, 96], strides = [1, 1]} : vector<8x96xf32> to vector<4x96xf32>
    %19 = vector.extract_strided_slice %17 {offsets = [0, 0], sizes = [4, 1], strides = [1, 1]} : vector<8x1xi1> to vector<4x1xi1>
    %cst_16 = arith.constant dense<0.000000e+00> : vector<4x96xf32>
    %20 = tpu.matmul %8, %1, %cst_16 {dimension_numbers = #tpu.dot_dimension_numbers<[1], [0], [0], [1], [0, 0, 1, 1], [], []>} : vector<4x32xf32>, vector<32x96xf32>, vector<4x96xf32> -> vector<4x96xf32>
    %21 = vector.extract_strided_slice %18 {offsets = [0, 0], sizes = [4, 32], strides = [1, 1]} : vector<4x96xf32> to vector<4x32xf32>
    %22 = vector.extract_strided_slice %20 {offsets = [0, 0], sizes = [4, 32], strides = [1, 1]} : vector<4x96xf32> to vector<4x32xf32>
    %23 = arith.addf %21, %22 : vector<4x32xf32>
    %24 = arith.negf %23 : vector<4x32xf32>
    %25 = math.exp %24 : vector<4x32xf32>
    %cst_17 = arith.constant 1.000000e+00 : f32
    %26 = vector.broadcast %cst_17 : f32 to vector<4x32xf32>
    %27 = arith.addf %26, %25 : vector<4x32xf32>
    %28 = arith.divf %26, %27 : vector<4x32xf32>
    %29 = vector.extract_strided_slice %18 {offsets = [0, 32], sizes = [4, 32], strides = [1, 1]} : vector<4x96xf32> to vector<4x32xf32>
    %30 = vector.extract_strided_slice %20 {offsets = [0, 32], sizes = [4, 32], strides = [1, 1]} : vector<4x96xf32> to vector<4x32xf32>
    %31 = arith.addf %29, %30 : vector<4x32xf32>
    %32 = arith.negf %31 : vector<4x32xf32>
    %33 = math.exp %32 : vector<4x32xf32>
    %cst_18 = arith.constant 1.000000e+00 : f32
    %34 = vector.broadcast %cst_18 : f32 to vector<4x32xf32>
    %35 = arith.addf %34, %33 : vector<4x32xf32>
    %36 = arith.divf %34, %35 : vector<4x32xf32>
    %37 = vector.extract_strided_slice %18 {offsets = [0, 64], sizes = [4, 32], strides = [1, 1]} : vector<4x96xf32> to vector<4x32xf32>
    %38 = vector.extract_strided_slice %20 {offsets = [0, 64], sizes = [4, 32], strides = [1, 1]} : vector<4x96xf32> to vector<4x32xf32>
    %39 = vector.broadcast %5 : vector<1x32xf32> to vector<4x32xf32>
    %40 = arith.addf %38, %39 : vector<4x32xf32>
    %41 = arith.mulf %28, %40 : vector<4x32xf32>
    %42 = arith.addf %37, %41 : vector<4x32xf32>
    %43 = math.tanh %42 : vector<4x32xf32>
    %cst_19 = arith.constant 1.000000e+00 : f32
    %44 = vector.broadcast %cst_19 : f32 to vector<4x32xf32>
    %45 = arith.subf %44, %36 : vector<4x32xf32>
    %46 = arith.mulf %45, %43 : vector<4x32xf32>
    %47 = arith.mulf %36, %8 : vector<4x32xf32>
    %48 = arith.addf %46, %47 : vector<4x32xf32>
    %49 = vector.shape_cast %19 : vector<4x1xi1> to vector<4x1xi1>
    %50 = vector.broadcast %49 : vector<4x1xi1> to vector<4x32xi1>
    %51 = arith.select %50, %48, %8 : vector<4x32xi1>, vector<4x32xf32>
    %cst_20 = arith.constant 0.000000e+00 : f32
    %52 = vector.shape_cast %19 : vector<4x1xi1> to vector<4x1xi1>
    %53 = vector.broadcast %52 : vector<4x1xi1> to vector<4x32xi1>
    %54 = vector.broadcast %cst_20 : f32 to vector<4x32xf32>
    %55 = arith.select %53, %51, %54 : vector<4x32xi1>, vector<4x32xf32>
    %56 = vector.extract_strided_slice %12 {offsets = [4, 0], sizes = [4, 96], strides = [1, 1]} : vector<8x96xf32> to vector<4x96xf32>
    %57 = vector.extract_strided_slice %17 {offsets = [4, 0], sizes = [4, 1], strides = [1, 1]} : vector<8x1xi1> to vector<4x1xi1>
    %cst_21 = arith.constant dense<0.000000e+00> : vector<4x96xf32>
    %58 = tpu.matmul %9, %3, %cst_21 {dimension_numbers = #tpu.dot_dimension_numbers<[1], [0], [0], [1], [0, 0, 1, 1], [], []>} : vector<4x32xf32>, vector<32x96xf32>, vector<4x96xf32> -> vector<4x96xf32>
    %59 = vector.extract_strided_slice %56 {offsets = [0, 0], sizes = [4, 32], strides = [1, 1]} : vector<4x96xf32> to vector<4x32xf32>
    %60 = vector.extract_strided_slice %58 {offsets = [0, 0], sizes = [4, 32], strides = [1, 1]} : vector<4x96xf32> to vector<4x32xf32>
    %61 = arith.addf %59, %60 : vector<4x32xf32>
    %62 = arith.negf %61 : vector<4x32xf32>
    %63 = math.exp %62 : vector<4x32xf32>
    %cst_22 = arith.constant 1.000000e+00 : f32
    %64 = vector.broadcast %cst_22 : f32 to vector<4x32xf32>
    %65 = arith.addf %64, %63 : vector<4x32xf32>
    %66 = arith.divf %64, %65 : vector<4x32xf32>
    %67 = vector.extract_strided_slice %56 {offsets = [0, 32], sizes = [4, 32], strides = [1, 1]} : vector<4x96xf32> to vector<4x32xf32>
    %68 = vector.extract_strided_slice %58 {offsets = [0, 32], sizes = [4, 32], strides = [1, 1]} : vector<4x96xf32> to vector<4x32xf32>
    %69 = arith.addf %67, %68 : vector<4x32xf32>
    %70 = arith.negf %69 : vector<4x32xf32>
    %71 = math.exp %70 : vector<4x32xf32>
    %cst_23 = arith.constant 1.000000e+00 : f32
    %72 = vector.broadcast %cst_23 : f32 to vector<4x32xf32>
    %73 = arith.addf %72, %71 : vector<4x32xf32>
    %74 = arith.divf %72, %73 : vector<4x32xf32>
    %75 = vector.extract_strided_slice %56 {offsets = [0, 64], sizes = [4, 32], strides = [1, 1]} : vector<4x96xf32> to vector<4x32xf32>
    %76 = vector.extract_strided_slice %58 {offsets = [0, 64], sizes = [4, 32], strides = [1, 1]} : vector<4x96xf32> to vector<4x32xf32>
    %77 = vector.broadcast %7 : vector<1x32xf32> to vector<4x32xf32>
    %78 = arith.addf %76, %77 : vector<4x32xf32>
    %79 = arith.mulf %66, %78 : vector<4x32xf32>
    %80 = arith.addf %75, %79 : vector<4x32xf32>
    %81 = math.tanh %80 : vector<4x32xf32>
    %cst_24 = arith.constant 1.000000e+00 : f32
    %82 = vector.broadcast %cst_24 : f32 to vector<4x32xf32>
    %83 = arith.subf %82, %74 : vector<4x32xf32>
    %84 = arith.mulf %83, %81 : vector<4x32xf32>
    %85 = arith.mulf %74, %9 : vector<4x32xf32>
    %86 = arith.addf %84, %85 : vector<4x32xf32>
    %87 = vector.shape_cast %57 : vector<4x1xi1> to vector<4x1xi1>
    %88 = vector.broadcast %87 : vector<4x1xi1> to vector<4x32xi1>
    %89 = arith.select %88, %86, %9 : vector<4x32xi1>, vector<4x32xf32>
    %cst_25 = arith.constant 0.000000e+00 : f32
    %90 = vector.shape_cast %57 : vector<4x1xi1> to vector<4x1xi1>
    %91 = vector.broadcast %90 : vector<4x1xi1> to vector<4x32xi1>
    %92 = vector.broadcast %cst_25 : f32 to vector<4x32xf32>
    %93 = arith.select %91, %89, %92 : vector<4x32xi1>, vector<4x32xf32>
    %94 = tpu.concatenate %55, %93 in 0 : vector<4x32xf32>, vector<4x32xf32> -> vector<8x32xf32>
    %95 = arith.index_cast %c0_i32 : i32 to index
    %c0_26 = arith.constant 0 : index
    %c0_27 = arith.constant 0 : index
    %96 = vector.load %arg4[%95, %c0_26, %c0_27] : memref<8x8x32xf32, #tpu.memory_space<vmem>>, vector<1x8x32xf32>
    %97 = vector.shape_cast %96 : vector<1x8x32xf32> to vector<8x32xf32>
    %98 = vector.shape_cast %94 : vector<8x32xf32> to vector<1x8x32xf32>
    tpu.vector_store %arg4[%95, %c0_26, %c0_27], %98 {strides = array<i32>} : memref<8x8x32xf32, #tpu.memory_space<vmem>>, vector<1x8x32xf32>,
    %c1_i32 = arith.constant 1 : i32
    %99 = arith.index_cast %c1_i32 : i32 to index
    %c0_28 = arith.constant 0 : index
    %c0_29 = arith.constant 0 : index
    %100 = vector.load %arg0[%99, %c0_28, %c0_29] : memref<8x8x96xf32, #tpu.memory_space<vmem>>, vector<1x8x96xf32>
    %101 = vector.shape_cast %100 : vector<1x8x96xf32> to vector<8x96xf32>
    %102 = arith.index_cast %c1_i32 : i32 to index
    %c0_30 = arith.constant 0 : index
    %c0_31 = arith.constant 0 : index
    %103 = vector.load %arg1[%102, %c0_30, %c0_31] : memref<8x8x1xf32, #tpu.memory_space<vmem>>, vector<1x8x1xf32>
    %104 = vector.shape_cast %103 : vector<1x8x1xf32> to vector<8x1xf32>
    %cst_32 = arith.constant 0.000000e+00 : f32
    %105 = vector.broadcast %cst_32 : f32 to vector<8x1xf32>
    %106 = arith.cmpf ogt, %104, %105 : vector<8x1xf32>
    %107 = vector.extract_strided_slice %101 {offsets = [0, 0], sizes = [4, 96], strides = [1, 1]} : vector<8x96xf32> to vector<4x96xf32>
    %108 = vector.extract_strided_slice %106 {offsets = [0, 0], sizes = [4, 1], strides = [1, 1]} : vector<8x1xi1> to vector<4x1xi1>
    %cst_33 = arith.constant dense<0.000000e+00> : vector<4x96xf32>
    %109 = tpu.matmul %51, %1, %cst_33 {dimension_numbers = #tpu.dot_dimension_numbers<[1], [0], [0], [1], [0, 0, 1, 1], [], []>} : vector<4x32xf32>, vector<32x96xf32>, vector<4x96xf32> -> vector<4x96xf32>
    %110 = vector.extract_strided_slice %107 {offsets = [0, 0], sizes = [4, 32], strides = [1, 1]} : vector<4x96xf32> to vector<4x32xf32>
    %111 = vector.extract_strided_slice %109 {offsets = [0, 0], sizes = [4, 32], strides = [1, 1]} : vector<4x96xf32> to vector<4x32xf32>
    %112 = arith.addf %110, %111 : vector<4x32xf32>
    %113 = arith.negf %112 : vector<4x32xf32>
    %114 = math.exp %113 : vector<4x32xf32>
    %cst_34 = arith.constant 1.000000e+00 : f32
    %115 = vector.broadcast %cst_34 : f32 to vector<4x32xf32>
    %116 = arith.addf %115, %114 : vector<4x32xf32>
    %117 = arith.divf %115, %116 : vector<4x32xf32>
    %118 = vector.extract_strided_slice %107 {offsets = [0, 32], sizes = [4, 32], strides = [1, 1]} : vector<4x96xf32> to vector<4x32xf32>
    %119 = vector.extract_strided_slice %109 {offsets = [0, 32], sizes = [4, 32], strides = [1, 1]} : vector<4x96xf32> to vector<4x32xf32>
    %120 = arith.addf %118, %119 : vector<4x32xf32>
    %121 = arith.negf %120 : vector<4x32xf32>
    %122 = math.exp %121 : vector<4x32xf32>
    %cst_35 = arith.constant 1.000000e+00 : f32
    %123 = vector.broadcast %cst_35 : f32 to vector<4x32xf32>
    %124 = arith.addf %123, %122 : vector<4x32xf32>
    %125 = arith.divf %123, %124 : vector<4x32xf32>
    %126 = vector.extract_strided_slice %107 {offsets = [0, 64], sizes = [4, 32], strides = [1, 1]} : vector<4x96xf32> to vector<4x32xf32>
    %127 = vector.extract_strided_slice %109 {offsets = [0, 64], sizes = [4, 32], strides = [1, 1]} : vector<4x96xf32> to vector<4x32xf32>
    %128 = vector.broadcast %5 : vector<1x32xf32> to vector<4x32xf32>
    %129 = arith.addf %127, %128 : vector<4x32xf32>
    %130 = arith.mulf %117, %129 : vector<4x32xf32>
    %131 = arith.addf %126, %130 : vector<4x32xf32>
    %132 = math.tanh %131 : vector<4x32xf32>
    %cst_36 = arith.constant 1.000000e+00 : f32
    %133 = vector.broadcast %cst_36 : f32 to vector<4x32xf32>
    %134 = arith.subf %133, %125 : vector<4x32xf32>
    %135 = arith.mulf %134, %132 : vector<4x32xf32>
    %136 = arith.mulf %125, %51 : vector<4x32xf32>
    %137 = arith.addf %135, %136 : vector<4x32xf32>
    %138 = vector.shape_cast %108 : vector<4x1xi1> to vector<4x1xi1>
    %139 = vector.broadcast %138 : vector<4x1xi1> to vector<4x32xi1>
    %140 = arith.select %139, %137, %51 : vector<4x32xi1>, vector<4x32xf32>
    %cst_37 = arith.constant 0.000000e+00 : f32
    %141 = vector.shape_cast %108 : vector<4x1xi1> to vector<4x1xi1>
    %142 = vector.broadcast %141 : vector<4x1xi1> to vector<4x32xi1>
    %143 = vector.broadcast %cst_37 : f32 to vector<4x32xf32>
    %144 = arith.select %142, %140, %143 : vector<4x32xi1>, vector<4x32xf32>
    %145 = vector.extract_strided_slice %101 {offsets = [4, 0], sizes = [4, 96], strides = [1, 1]} : vector<8x96xf32> to vector<4x96xf32>
    %146 = vector.extract_strided_slice %106 {offsets = [4, 0], sizes = [4, 1], strides = [1, 1]} : vector<8x1xi1> to vector<4x1xi1>
    %cst_38 = arith.constant dense<0.000000e+00> : vector<4x96xf32>
    %147 = tpu.matmul %89, %3, %cst_38 {dimension_numbers = #tpu.dot_dimension_numbers<[1], [0], [0], [1], [0, 0, 1, 1], [], []>} : vector<4x32xf32>, vector<32x96xf32>, vector<4x96xf32> -> vector<4x96xf32>
    %148 = vector.extract_strided_slice %145 {offsets = [0, 0], sizes = [4, 32], strides = [1, 1]} : vector<4x96xf32> to vector<4x32xf32>
    %149 = vector.extract_strided_slice %147 {offsets = [0, 0], sizes = [4, 32], strides = [1, 1]} : vector<4x96xf32> to vector<4x32xf32>
    %150 = arith.addf %148, %149 : vector<4x32xf32>
    %151 = arith.negf %150 : vector<4x32xf32>
    %152 = math.exp %151 : vector<4x32xf32>
    %cst_39 = arith.constant 1.000000e+00 : f32
    %153 = vector.broadcast %cst_39 : f32 to vector<4x32xf32>
    %154 = arith.addf %153, %152 : vector<4x32xf32>
    %155 = arith.divf %153, %154 : vector<4x32xf32>
    %156 = vector.extract_strided_slice %145 {offsets = [0, 32], sizes = [4, 32], strides = [1, 1]} : vector<4x96xf32> to vector<4x32xf32>
    %157 = vector.extract_strided_slice %147 {offsets = [0, 32], sizes = [4, 32], strides = [1, 1]} : vector<4x96xf32> to vector<4x32xf32>
    %158 = arith.addf %156, %157 : vector<4x32xf32>
    %159 = arith.negf %158 : vector<4x32xf32>
    %160 = math.exp %159 : vector<4x32xf32>
    %cst_40 = arith.constant 1.000000e+00 : f32
    %161 = vector.broadcast %cst_40 : f32 to vector<4x32xf32>
    %162 = arith.addf %161, %160 : vector<4x32xf32>
    %163 = arith.divf %161, %162 : vector<4x32xf32>
    %164 = vector.extract_strided_slice %145 {offsets = [0, 64], sizes = [4, 32], strides = [1, 1]} : vector<4x96xf32> to vector<4x32xf32>
    %165 = vector.extract_strided_slice %147 {offsets = [0, 64], sizes = [4, 32], strides = [1, 1]} : vector<4x96xf32> to vector<4x32xf32>
    %166 = vector.broadcast %7 : vector<1x32xf32> to vector<4x32xf32>
    %167 = arith.addf %165, %166 : vector<4x32xf32>
    %168 = arith.mulf %155, %167 : vector<4x32xf32>
    %169 = arith.addf %164, %168 : vector<4x32xf32>
    %170 = math.tanh %169 : vector<4x32xf32>
    %cst_41 = arith.constant 1.000000e+00 : f32
    %171 = vector.broadcast %cst_41 : f32 to vector<4x32xf32>
    %172 = arith.subf %171, %163 : vector<4x32xf32>
    %173 = arith.mulf %172, %170 : vector<4x32xf32>
    %174 = arith.mulf %163, %89 : vector<4x32xf32>
    %175 = arith.addf %173, %174 : vector<4x32xf32>
    %176 = vector.shape_cast %146 : vector<4x1xi1> to vector<4x1xi1>
    %177 = vector.broadcast %176 : vector<4x1xi1> to vector<4x32xi1>
    %178 = arith.select %177, %175, %89 : vector<4x32xi1>, vector<4x32xf32>
    %cst_42 = arith.constant 0.000000e+00 : f32
    %179 = vector.shape_cast %146 : vector<4x1xi1> to vector<4x1xi1>
    %180 = vector.broadcast %179 : vector<4x1xi1> to vector<4x32xi1>
    %181 = vector.broadcast %cst_42 : f32 to vector<4x32xf32>
    %182 = arith.select %180, %178, %181 : vector<4x32xi1>, vector<4x32xf32>
    %183 = tpu.concatenate %144, %182 in 0 : vector<4x32xf32>, vector<4x32xf32> -> vector<8x32xf32>
    %184 = arith.index_cast %c1_i32 : i32 to index
    %c0_43 = arith.constant 0 : index
    %c0_44 = arith.constant 0 : index
    %185 = vector.load %arg4[%184, %c0_43, %c0_44] : memref<8x8x32xf32, #tpu.memory_space<vmem>>, vector<1x8x32xf32>
    %186 = vector.shape_cast %185 : vector<1x8x32xf32> to vector<8x32xf32>
    %187 = vector.shape_cast %183 : vector<8x32xf32> to vector<1x8x32xf32>
    tpu.vector_store %arg4[%184, %c0_43, %c0_44], %187 {strides = array<i32>} : memref<8x8x32xf32, #tpu.memory_space<vmem>>, vector<1x8x32xf32>,
    %c2_i32 = arith.constant 2 : i32
    %188 = arith.index_cast %c2_i32 : i32 to index
    %c0_45 = arith.constant 0 : index
    %c0_46 = arith.constant 0 : index
    %189 = vector.load %arg0[%188, %c0_45, %c0_46] : memref<8x8x96xf32, #tpu.memory_space<vmem>>, vector<1x8x96xf32>
    %190 = vector.shape_cast %189 : vector<1x8x96xf32> to vector<8x96xf32>
    %191 = arith.index_cast %c2_i32 : i32 to index
    %c0_47 = arith.constant 0 : index
    %c0_48 = arith.constant 0 : index
    %192 = vector.load %arg1[%191, %c0_47, %c0_48] : memref<8x8x1xf32, #tpu.memory_space<vmem>>, vector<1x8x1xf32>
    %193 = vector.shape_cast %192 : vector<1x8x1xf32> to vector<8x1xf32>
    %cst_49 = arith.constant 0.000000e+00 : f32
    %194 = vector.broadcast %cst_49 : f32 to vector<8x1xf32>
    %195 = arith.cmpf ogt, %193, %194 : vector<8x1xf32>
    %196 = vector.extract_strided_slice %190 {offsets = [0, 0], sizes = [4, 96], strides = [1, 1]} : vector<8x96xf32> to vector<4x96xf32>
    %197 = vector.extract_strided_slice %195 {offsets = [0, 0], sizes = [4, 1], strides = [1, 1]} : vector<8x1xi1> to vector<4x1xi1>
    %cst_50 = arith.constant dense<0.000000e+00> : vector<4x96xf32>
    %198 = tpu.matmul %140, %1, %cst_50 {dimension_numbers = #tpu.dot_dimension_numbers<[1], [0], [0], [1], [0, 0, 1, 1], [], []>} : vector<4x32xf32>, vector<32x96xf32>, vector<4x96xf32> -> vector<4x96xf32>
    %199 = vector.extract_strided_slice %196 {offsets = [0, 0], sizes = [4, 32], strides = [1, 1]} : vector<4x96xf32> to vector<4x32xf32>
    %200 = vector.extract_strided_slice %198 {offsets = [0, 0], sizes = [4, 32], strides = [1, 1]} : vector<4x96xf32> to vector<4x32xf32>
    %201 = arith.addf %199, %200 : vector<4x32xf32>
    %202 = arith.negf %201 : vector<4x32xf32>
    %203 = math.exp %202 : vector<4x32xf32>
    %cst_51 = arith.constant 1.000000e+00 : f32
    %204 = vector.broadcast %cst_51 : f32 to vector<4x32xf32>
    %205 = arith.addf %204, %203 : vector<4x32xf32>
    %206 = arith.divf %204, %205 : vector<4x32xf32>
    %207 = vector.extract_strided_slice %196 {offsets = [0, 32], sizes = [4, 32], strides = [1, 1]} : vector<4x96xf32> to vector<4x32xf32>
    %208 = vector.extract_strided_slice %198 {offsets = [0, 32], sizes = [4, 32], strides = [1, 1]} : vector<4x96xf32> to vector<4x32xf32>
    %209 = arith.addf %207, %208 : vector<4x32xf32>
    %210 = arith.negf %209 : vector<4x32xf32>
    %211 = math.exp %210 : vector<4x32xf32>
    %cst_52 = arith.constant 1.000000e+00 : f32
    %212 = vector.broadcast %cst_52 : f32 to vector<4x32xf32>
    %213 = arith.addf %212, %211 : vector<4x32xf32>
    %214 = arith.divf %212, %213 : vector<4x32xf32>
    %215 = vector.extract_strided_slice %196 {offsets = [0, 64], sizes = [4, 32], strides = [1, 1]} : vector<4x96xf32> to vector<4x32xf32>
    %216 = vector.extract_strided_slice %198 {offsets = [0, 64], sizes = [4, 32], strides = [1, 1]} : vector<4x96xf32> to vector<4x32xf32>
    %217 = vector.broadcast %5 : vector<1x32xf32> to vector<4x32xf32>
    %218 = arith.addf %216, %217 : vector<4x32xf32>
    %219 = arith.mulf %206, %218 : vector<4x32xf32>
    %220 = arith.addf %215, %219 : vector<4x32xf32>
    %221 = math.tanh %220 : vector<4x32xf32>
    %cst_53 = arith.constant 1.000000e+00 : f32
    %222 = vector.broadcast %cst_53 : f32 to vector<4x32xf32>
    %223 = arith.subf %222, %214 : vector<4x32xf32>
    %224 = arith.mulf %223, %221 : vector<4x32xf32>
    %225 = arith.mulf %214, %140 : vector<4x32xf32>
    %226 = arith.addf %224, %225 : vector<4x32xf32>
    %227 = vector.shape_cast %197 : vector<4x1xi1> to vector<4x1xi1>
    %228 = vector.broadcast %227 : vector<4x1xi1> to vector<4x32xi1>
    %229 = arith.select %228, %226, %140 : vector<4x32xi1>, vector<4x32xf32>
    %cst_54 = arith.constant 0.000000e+00 : f32
    %230 = vector.shape_cast %197 : vector<4x1xi1> to vector<4x1xi1>
    %231 = vector.broadcast %230 : vector<4x1xi1> to vector<4x32xi1>
    %232 = vector.broadcast %cst_54 : f32 to vector<4x32xf32>
    %233 = arith.select %231, %229, %232 : vector<4x32xi1>, vector<4x32xf32>
    %234 = vector.extract_strided_slice %190 {offsets = [4, 0], sizes = [4, 96], strides = [1, 1]} : vector<8x96xf32> to vector<4x96xf32>
    %235 = vector.extract_strided_slice %195 {offsets = [4, 0], sizes = [4, 1], strides = [1, 1]} : vector<8x1xi1> to vector<4x1xi1>
    %cst_55 = arith.constant dense<0.000000e+00> : vector<4x96xf32>
    %236 = tpu.matmul %178, %3, %cst_55 {dimension_numbers = #tpu.dot_dimension_numbers<[1], [0], [0], [1], [0, 0, 1, 1], [], []>} : vector<4x32xf32>, vector<32x96xf32>, vector<4x96xf32> -> vector<4x96xf32>
    %237 = vector.extract_strided_slice %234 {offsets = [0, 0], sizes = [4, 32], strides = [1, 1]} : vector<4x96xf32> to vector<4x32xf32>
    %238 = vector.extract_strided_slice %236 {offsets = [0, 0], sizes = [4, 32], strides = [1, 1]} : vector<4x96xf32> to vector<4x32xf32>
    %239 = arith.addf %237, %238 : vector<4x32xf32>
    %240 = arith.negf %239 : vector<4x32xf32>
    %241 = math.exp %240 : vector<4x32xf32>
    %cst_56 = arith.constant 1.000000e+00 : f32
    %242 = vector.broadcast %cst_56 : f32 to vector<4x32xf32>
    %243 = arith.addf %242, %241 : vector<4x32xf32>
    %244 = arith.divf %242, %243 : vector<4x32xf32>
    %245 = vector.extract_strided_slice %234 {offsets = [0, 32], sizes = [4, 32], strides = [1, 1]} : vector<4x96xf32> to vector<4x32xf32>
    %246 = vector.extract_strided_slice %236 {offsets = [0, 32], sizes = [4, 32], strides = [1, 1]} : vector<4x96xf32> to vector<4x32xf32>
    %247 = arith.addf %245, %246 : vector<4x32xf32>
    %248 = arith.negf %247 : vector<4x32xf32>
    %249 = math.exp %248 : vector<4x32xf32>
    %cst_57 = arith.constant 1.000000e+00 : f32
    %250 = vector.broadcast %cst_57 : f32 to vector<4x32xf32>
    %251 = arith.addf %250, %249 : vector<4x32xf32>
    %252 = arith.divf %250, %251 : vector<4x32xf32>
    %253 = vector.extract_strided_slice %234 {offsets = [0, 64], sizes = [4, 32], strides = [1, 1]} : vector<4x96xf32> to vector<4x32xf32>
    %254 = vector.extract_strided_slice %236 {offsets = [0, 64], sizes = [4, 32], strides = [1, 1]} : vector<4x96xf32> to vector<4x32xf32>
    %255 = vector.broadcast %7 : vector<1x32xf32> to vector<4x32xf32>
    %256 = arith.addf %254, %255 : vector<4x32xf32>
    %257 = arith.mulf %244, %256 : vector<4x32xf32>
    %258 = arith.addf %253, %257 : vector<4x32xf32>
    %259 = math.tanh %258 : vector<4x32xf32>
    %cst_58 = arith.constant 1.000000e+00 : f32
    %260 = vector.broadcast %cst_58 : f32 to vector<4x32xf32>
    %261 = arith.subf %260, %252 : vector<4x32xf32>
    %262 = arith.mulf %261, %259 : vector<4x32xf32>
    %263 = arith.mulf %252, %178 : vector<4x32xf32>
    %264 = arith.addf %262, %263 : vector<4x32xf32>
    %265 = vector.shape_cast %235 : vector<4x1xi1> to vector<4x1xi1>
    %266 = vector.broadcast %265 : vector<4x1xi1> to vector<4x32xi1>
    %267 = arith.select %266, %264, %178 : vector<4x32xi1>, vector<4x32xf32>
    %cst_59 = arith.constant 0.000000e+00 : f32
    %268 = vector.shape_cast %235 : vector<4x1xi1> to vector<4x1xi1>
    %269 = vector.broadcast %268 : vector<4x1xi1> to vector<4x32xi1>
    %270 = vector.broadcast %cst_59 : f32 to vector<4x32xf32>
    %271 = arith.select %269, %267, %270 : vector<4x32xi1>, vector<4x32xf32>
    %272 = tpu.concatenate %233, %271 in 0 : vector<4x32xf32>, vector<4x32xf32> -> vector<8x32xf32>
    %273 = arith.index_cast %c2_i32 : i32 to index
    %c0_60 = arith.constant 0 : index
    %c0_61 = arith.constant 0 : index
    %274 = vector.load %arg4[%273, %c0_60, %c0_61] : memref<8x8x32xf32, #tpu.memory_space<vmem>>, vector<1x8x32xf32>
    %275 = vector.shape_cast %274 : vector<1x8x32xf32> to vector<8x32xf32>
    %276 = vector.shape_cast %272 : vector<8x32xf32> to vector<1x8x32xf32>
    tpu.vector_store %arg4[%273, %c0_60, %c0_61], %276 {strides = array<i32>} : memref<8x8x32xf32, #tpu.memory_space<vmem>>, vector<1x8x32xf32>,
    %c3_i32 = arith.constant 3 : i32
    %277 = arith.index_cast %c3_i32 : i32 to index
    %c0_62 = arith.constant 0 : index
    %c0_63 = arith.constant 0 : index
    %278 = vector.load %arg0[%277, %c0_62, %c0_63] : memref<8x8x96xf32, #tpu.memory_space<vmem>>, vector<1x8x96xf32>
    %279 = vector.shape_cast %278 : vector<1x8x96xf32> to vector<8x96xf32>
    %280 = arith.index_cast %c3_i32 : i32 to index
    %c0_64 = arith.constant 0 : index
    %c0_65 = arith.constant 0 : index
    %281 = vector.load %arg1[%280, %c0_64, %c0_65] : memref<8x8x1xf32, #tpu.memory_space<vmem>>, vector<1x8x1xf32>
    %282 = vector.shape_cast %281 : vector<1x8x1xf32> to vector<8x1xf32>
    %cst_66 = arith.constant 0.000000e+00 : f32
    %283 = vector.broadcast %cst_66 : f32 to vector<8x1xf32>
    %284 = arith.cmpf ogt, %282, %283 : vector<8x1xf32>
    %285 = vector.extract_strided_slice %279 {offsets = [0, 0], sizes = [4, 96], strides = [1, 1]} : vector<8x96xf32> to vector<4x96xf32>
    %286 = vector.extract_strided_slice %284 {offsets = [0, 0], sizes = [4, 1], strides = [1, 1]} : vector<8x1xi1> to vector<4x1xi1>
    %cst_67 = arith.constant dense<0.000000e+00> : vector<4x96xf32>
    %287 = tpu.matmul %229, %1, %cst_67 {dimension_numbers = #tpu.dot_dimension_numbers<[1], [0], [0], [1], [0, 0, 1, 1], [], []>} : vector<4x32xf32>, vector<32x96xf32>, vector<4x96xf32> -> vector<4x96xf32>
    %288 = vector.extract_strided_slice %285 {offsets = [0, 0], sizes = [4, 32], strides = [1, 1]} : vector<4x96xf32> to vector<4x32xf32>
    %289 = vector.extract_strided_slice %287 {offsets = [0, 0], sizes = [4, 32], strides = [1, 1]} : vector<4x96xf32> to vector<4x32xf32>
    %290 = arith.addf %288, %289 : vector<4x32xf32>
    %291 = arith.negf %290 : vector<4x32xf32>
    %292 = math.exp %291 : vector<4x32xf32>
    %cst_68 = arith.constant 1.000000e+00 : f32
    %293 = vector.broadcast %cst_68 : f32 to vector<4x32xf32>
    %294 = arith.addf %293, %292 : vector<4x32xf32>
    %295 = arith.divf %293, %294 : vector<4x32xf32>
    %296 = vector.extract_strided_slice %285 {offsets = [0, 32], sizes = [4, 32], strides = [1, 1]} : vector<4x96xf32> to vector<4x32xf32>
    %297 = vector.extract_strided_slice %287 {offsets = [0, 32], sizes = [4, 32], strides = [1, 1]} : vector<4x96xf32> to vector<4x32xf32>
    %298 = arith.addf %296, %297 : vector<4x32xf32>
    %299 = arith.negf %298 : vector<4x32xf32>
    %300 = math.exp %299 : vector<4x32xf32>
    %cst_69 = arith.constant 1.000000e+00 : f32
    %301 = vector.broadcast %cst_69 : f32 to vector<4x32xf32>
    %302 = arith.addf %301, %300 : vector<4x32xf32>
    %303 = arith.divf %301, %302 : vector<4x32xf32>
    %304 = vector.extract_strided_slice %285 {offsets = [0, 64], sizes = [4, 32], strides = [1, 1]} : vector<4x96xf32> to vector<4x32xf32>
    %305 = vector.extract_strided_slice %287 {offsets = [0, 64], sizes = [4, 32], strides = [1, 1]} : vector<4x96xf32> to vector<4x32xf32>
    %306 = vector.broadcast %5 : vector<1x32xf32> to vector<4x32xf32>
    %307 = arith.addf %305, %306 : vector<4x32xf32>
    %308 = arith.mulf %295, %307 : vector<4x32xf32>
    %309 = arith.addf %304, %308 : vector<4x32xf32>
    %310 = math.tanh %309 : vector<4x32xf32>
    %cst_70 = arith.constant 1.000000e+00 : f32
    %311 = vector.broadcast %cst_70 : f32 to vector<4x32xf32>
    %312 = arith.subf %311, %303 : vector<4x32xf32>
    %313 = arith.mulf %312, %310 : vector<4x32xf32>
    %314 = arith.mulf %303, %229 : vector<4x32xf32>
    %315 = arith.addf %313, %314 : vector<4x32xf32>
    %316 = vector.shape_cast %286 : vector<4x1xi1> to vector<4x1xi1>
    %317 = vector.broadcast %316 : vector<4x1xi1> to vector<4x32xi1>
    %318 = arith.select %317, %315, %229 : vector<4x32xi1>, vector<4x32xf32>
    %cst_71 = arith.constant 0.000000e+00 : f32
    %319 = vector.shape_cast %286 : vector<4x1xi1> to vector<4x1xi1>
    %320 = vector.broadcast %319 : vector<4x1xi1> to vector<4x32xi1>
    %321 = vector.broadcast %cst_71 : f32 to vector<4x32xf32>
    %322 = arith.select %320, %318, %321 : vector<4x32xi1>, vector<4x32xf32>
    %323 = vector.extract_strided_slice %279 {offsets = [4, 0], sizes = [4, 96], strides = [1, 1]} : vector<8x96xf32> to vector<4x96xf32>
    %324 = vector.extract_strided_slice %284 {offsets = [4, 0], sizes = [4, 1], strides = [1, 1]} : vector<8x1xi1> to vector<4x1xi1>
    %cst_72 = arith.constant dense<0.000000e+00> : vector<4x96xf32>
    %325 = tpu.matmul %267, %3, %cst_72 {dimension_numbers = #tpu.dot_dimension_numbers<[1], [0], [0], [1], [0, 0, 1, 1], [], []>} : vector<4x32xf32>, vector<32x96xf32>, vector<4x96xf32> -> vector<4x96xf32>
    %326 = vector.extract_strided_slice %323 {offsets = [0, 0], sizes = [4, 32], strides = [1, 1]} : vector<4x96xf32> to vector<4x32xf32>
    %327 = vector.extract_strided_slice %325 {offsets = [0, 0], sizes = [4, 32], strides = [1, 1]} : vector<4x96xf32> to vector<4x32xf32>
    %328 = arith.addf %326, %327 : vector<4x32xf32>
    %329 = arith.negf %328 : vector<4x32xf32>
    %330 = math.exp %329 : vector<4x32xf32>
    %cst_73 = arith.constant 1.000000e+00 : f32
    %331 = vector.broadcast %cst_73 : f32 to vector<4x32xf32>
    %332 = arith.addf %331, %330 : vector<4x32xf32>
    %333 = arith.divf %331, %332 : vector<4x32xf32>
    %334 = vector.extract_strided_slice %323 {offsets = [0, 32], sizes = [4, 32], strides = [1, 1]} : vector<4x96xf32> to vector<4x32xf32>
    %335 = vector.extract_strided_slice %325 {offsets = [0, 32], sizes = [4, 32], strides = [1, 1]} : vector<4x96xf32> to vector<4x32xf32>
    %336 = arith.addf %334, %335 : vector<4x32xf32>
    %337 = arith.negf %336 : vector<4x32xf32>
    %338 = math.exp %337 : vector<4x32xf32>
    %cst_74 = arith.constant 1.000000e+00 : f32
    %339 = vector.broadcast %cst_74 : f32 to vector<4x32xf32>
    %340 = arith.addf %339, %338 : vector<4x32xf32>
    %341 = arith.divf %339, %340 : vector<4x32xf32>
    %342 = vector.extract_strided_slice %323 {offsets = [0, 64], sizes = [4, 32], strides = [1, 1]} : vector<4x96xf32> to vector<4x32xf32>
    %343 = vector.extract_strided_slice %325 {offsets = [0, 64], sizes = [4, 32], strides = [1, 1]} : vector<4x96xf32> to vector<4x32xf32>
    %344 = vector.broadcast %7 : vector<1x32xf32> to vector<4x32xf32>
    %345 = arith.addf %343, %344 : vector<4x32xf32>
    %346 = arith.mulf %333, %345 : vector<4x32xf32>
    %347 = arith.addf %342, %346 : vector<4x32xf32>
    %348 = math.tanh %347 : vector<4x32xf32>
    %cst_75 = arith.constant 1.000000e+00 : f32
    %349 = vector.broadcast %cst_75 : f32 to vector<4x32xf32>
    %350 = arith.subf %349, %341 : vector<4x32xf32>
    %351 = arith.mulf %350, %348 : vector<4x32xf32>
    %352 = arith.mulf %341, %267 : vector<4x32xf32>
    %353 = arith.addf %351, %352 : vector<4x32xf32>
    %354 = vector.shape_cast %324 : vector<4x1xi1> to vector<4x1xi1>
    %355 = vector.broadcast %354 : vector<4x1xi1> to vector<4x32xi1>
    %356 = arith.select %355, %353, %267 : vector<4x32xi1>, vector<4x32xf32>
    %cst_76 = arith.constant 0.000000e+00 : f32
    %357 = vector.shape_cast %324 : vector<4x1xi1> to vector<4x1xi1>
    %358 = vector.broadcast %357 : vector<4x1xi1> to vector<4x32xi1>
    %359 = vector.broadcast %cst_76 : f32 to vector<4x32xf32>
    %360 = arith.select %358, %356, %359 : vector<4x32xi1>, vector<4x32xf32>
    %361 = tpu.concatenate %322, %360 in 0 : vector<4x32xf32>, vector<4x32xf32> -> vector<8x32xf32>
    %362 = arith.index_cast %c3_i32 : i32 to index
    %c0_77 = arith.constant 0 : index
    %c0_78 = arith.constant 0 : index
    %363 = vector.load %arg4[%362, %c0_77, %c0_78] : memref<8x8x32xf32, #tpu.memory_space<vmem>>, vector<1x8x32xf32>
    %364 = vector.shape_cast %363 : vector<1x8x32xf32> to vector<8x32xf32>
    %365 = vector.shape_cast %361 : vector<8x32xf32> to vector<1x8x32xf32>
    tpu.vector_store %arg4[%362, %c0_77, %c0_78], %365 {strides = array<i32>} : memref<8x8x32xf32, #tpu.memory_space<vmem>>, vector<1x8x32xf32>,
    %c4_i32 = arith.constant 4 : i32
    %366 = arith.index_cast %c4_i32 : i32 to index
    %c0_79 = arith.constant 0 : index
    %c0_80 = arith.constant 0 : index
    %367 = vector.load %arg0[%366, %c0_79, %c0_80] : memref<8x8x96xf32, #tpu.memory_space<vmem>>, vector<1x8x96xf32>
    %368 = vector.shape_cast %367 : vector<1x8x96xf32> to vector<8x96xf32>
    %369 = arith.index_cast %c4_i32 : i32 to index
    %c0_81 = arith.constant 0 : index
    %c0_82 = arith.constant 0 : index
    %370 = vector.load %arg1[%369, %c0_81, %c0_82] : memref<8x8x1xf32, #tpu.memory_space<vmem>>, vector<1x8x1xf32>
    %371 = vector.shape_cast %370 : vector<1x8x1xf32> to vector<8x1xf32>
    %cst_83 = arith.constant 0.000000e+00 : f32
    %372 = vector.broadcast %cst_83 : f32 to vector<8x1xf32>
    %373 = arith.cmpf ogt, %371, %372 : vector<8x1xf32>
    %374 = vector.extract_strided_slice %368 {offsets = [0, 0], sizes = [4, 96], strides = [1, 1]} : vector<8x96xf32> to vector<4x96xf32>
    %375 = vector.extract_strided_slice %373 {offsets = [0, 0], sizes = [4, 1], strides = [1, 1]} : vector<8x1xi1> to vector<4x1xi1>
    %cst_84 = arith.constant dense<0.000000e+00> : vector<4x96xf32>
    %376 = tpu.matmul %318, %1, %cst_84 {dimension_numbers = #tpu.dot_dimension_numbers<[1], [0], [0], [1], [0, 0, 1, 1], [], []>} : vector<4x32xf32>, vector<32x96xf32>, vector<4x96xf32> -> vector<4x96xf32>
    %377 = vector.extract_strided_slice %374 {offsets = [0, 0], sizes = [4, 32], strides = [1, 1]} : vector<4x96xf32> to vector<4x32xf32>
    %378 = vector.extract_strided_slice %376 {offsets = [0, 0], sizes = [4, 32], strides = [1, 1]} : vector<4x96xf32> to vector<4x32xf32>
    %379 = arith.addf %377, %378 : vector<4x32xf32>
    %380 = arith.negf %379 : vector<4x32xf32>
    %381 = math.exp %380 : vector<4x32xf32>
    %cst_85 = arith.constant 1.000000e+00 : f32
    %382 = vector.broadcast %cst_85 : f32 to vector<4x32xf32>
    %383 = arith.addf %382, %381 : vector<4x32xf32>
    %384 = arith.divf %382, %383 : vector<4x32xf32>
    %385 = vector.extract_strided_slice %374 {offsets = [0, 32], sizes = [4, 32], strides = [1, 1]} : vector<4x96xf32> to vector<4x32xf32>
    %386 = vector.extract_strided_slice %376 {offsets = [0, 32], sizes = [4, 32], strides = [1, 1]} : vector<4x96xf32> to vector<4x32xf32>
    %387 = arith.addf %385, %386 : vector<4x32xf32>
    %388 = arith.negf %387 : vector<4x32xf32>
    %389 = math.exp %388 : vector<4x32xf32>
    %cst_86 = arith.constant 1.000000e+00 : f32
    %390 = vector.broadcast %cst_86 : f32 to vector<4x32xf32>
    %391 = arith.addf %390, %389 : vector<4x32xf32>
    %392 = arith.divf %390, %391 : vector<4x32xf32>
    %393 = vector.extract_strided_slice %374 {offsets = [0, 64], sizes = [4, 32], strides = [1, 1]} : vector<4x96xf32> to vector<4x32xf32>
    %394 = vector.extract_strided_slice %376 {offsets = [0, 64], sizes = [4, 32], strides = [1, 1]} : vector<4x96xf32> to vector<4x32xf32>
    %395 = vector.broadcast %5 : vector<1x32xf32> to vector<4x32xf32>
    %396 = arith.addf %394, %395 : vector<4x32xf32>
    %397 = arith.mulf %384, %396 : vector<4x32xf32>
    %398 = arith.addf %393, %397 : vector<4x32xf32>
    %399 = math.tanh %398 : vector<4x32xf32>
    %cst_87 = arith.constant 1.000000e+00 : f32
    %400 = vector.broadcast %cst_87 : f32 to vector<4x32xf32>
    %401 = arith.subf %400, %392 : vector<4x32xf32>
    %402 = arith.mulf %401, %399 : vector<4x32xf32>
    %403 = arith.mulf %392, %318 : vector<4x32xf32>
    %404 = arith.addf %402, %403 : vector<4x32xf32>
    %405 = vector.shape_cast %375 : vector<4x1xi1> to vector<4x1xi1>
    %406 = vector.broadcast %405 : vector<4x1xi1> to vector<4x32xi1>
    %407 = arith.select %406, %404, %318 : vector<4x32xi1>, vector<4x32xf32>
    %cst_88 = arith.constant 0.000000e+00 : f32
    %408 = vector.shape_cast %375 : vector<4x1xi1> to vector<4x1xi1>
    %409 = vector.broadcast %408 : vector<4x1xi1> to vector<4x32xi1>
    %410 = vector.broadcast %cst_88 : f32 to vector<4x32xf32>
    %411 = arith.select %409, %407, %410 : vector<4x32xi1>, vector<4x32xf32>
    %412 = vector.extract_strided_slice %368 {offsets = [4, 0], sizes = [4, 96], strides = [1, 1]} : vector<8x96xf32> to vector<4x96xf32>
    %413 = vector.extract_strided_slice %373 {offsets = [4, 0], sizes = [4, 1], strides = [1, 1]} : vector<8x1xi1> to vector<4x1xi1>
    %cst_89 = arith.constant dense<0.000000e+00> : vector<4x96xf32>
    %414 = tpu.matmul %356, %3, %cst_89 {dimension_numbers = #tpu.dot_dimension_numbers<[1], [0], [0], [1], [0, 0, 1, 1], [], []>} : vector<4x32xf32>, vector<32x96xf32>, vector<4x96xf32> -> vector<4x96xf32>
    %415 = vector.extract_strided_slice %412 {offsets = [0, 0], sizes = [4, 32], strides = [1, 1]} : vector<4x96xf32> to vector<4x32xf32>
    %416 = vector.extract_strided_slice %414 {offsets = [0, 0], sizes = [4, 32], strides = [1, 1]} : vector<4x96xf32> to vector<4x32xf32>
    %417 = arith.addf %415, %416 : vector<4x32xf32>
    %418 = arith.negf %417 : vector<4x32xf32>
    %419 = math.exp %418 : vector<4x32xf32>
    %cst_90 = arith.constant 1.000000e+00 : f32
    %420 = vector.broadcast %cst_90 : f32 to vector<4x32xf32>
    %421 = arith.addf %420, %419 : vector<4x32xf32>
    %422 = arith.divf %420, %421 : vector<4x32xf32>
    %423 = vector.extract_strided_slice %412 {offsets = [0, 32], sizes = [4, 32], strides = [1, 1]} : vector<4x96xf32> to vector<4x32xf32>
    %424 = vector.extract_strided_slice %414 {offsets = [0, 32], sizes = [4, 32], strides = [1, 1]} : vector<4x96xf32> to vector<4x32xf32>
    %425 = arith.addf %423, %424 : vector<4x32xf32>
    %426 = arith.negf %425 : vector<4x32xf32>
    %427 = math.exp %426 : vector<4x32xf32>
    %cst_91 = arith.constant 1.000000e+00 : f32
    %428 = vector.broadcast %cst_91 : f32 to vector<4x32xf32>
    %429 = arith.addf %428, %427 : vector<4x32xf32>
    %430 = arith.divf %428, %429 : vector<4x32xf32>
    %431 = vector.extract_strided_slice %412 {offsets = [0, 64], sizes = [4, 32], strides = [1, 1]} : vector<4x96xf32> to vector<4x32xf32>
    %432 = vector.extract_strided_slice %414 {offsets = [0, 64], sizes = [4, 32], strides = [1, 1]} : vector<4x96xf32> to vector<4x32xf32>
    %433 = vector.broadcast %7 : vector<1x32xf32> to vector<4x32xf32>
    %434 = arith.addf %432, %433 : vector<4x32xf32>
    %435 = arith.mulf %422, %434 : vector<4x32xf32>
    %436 = arith.addf %431, %435 : vector<4x32xf32>
    %437 = math.tanh %436 : vector<4x32xf32>
    %cst_92 = arith.constant 1.000000e+00 : f32
    %438 = vector.broadcast %cst_92 : f32 to vector<4x32xf32>
    %439 = arith.subf %438, %430 : vector<4x32xf32>
    %440 = arith.mulf %439, %437 : vector<4x32xf32>
    %441 = arith.mulf %430, %356 : vector<4x32xf32>
    %442 = arith.addf %440, %441 : vector<4x32xf32>
    %443 = vector.shape_cast %413 : vector<4x1xi1> to vector<4x1xi1>
    %444 = vector.broadcast %443 : vector<4x1xi1> to vector<4x32xi1>
    %445 = arith.select %444, %442, %356 : vector<4x32xi1>, vector<4x32xf32>
    %cst_93 = arith.constant 0.000000e+00 : f32
    %446 = vector.shape_cast %413 : vector<4x1xi1> to vector<4x1xi1>
    %447 = vector.broadcast %446 : vector<4x1xi1> to vector<4x32xi1>
    %448 = vector.broadcast %cst_93 : f32 to vector<4x32xf32>
    %449 = arith.select %447, %445, %448 : vector<4x32xi1>, vector<4x32xf32>
    %450 = tpu.concatenate %411, %449 in 0 : vector<4x32xf32>, vector<4x32xf32> -> vector<8x32xf32>
    %451 = arith.index_cast %c4_i32 : i32 to index
    %c0_94 = arith.constant 0 : index
    %c0_95 = arith.constant 0 : index
    %452 = vector.load %arg4[%451, %c0_94, %c0_95] : memref<8x8x32xf32, #tpu.memory_space<vmem>>, vector<1x8x32xf32>
    %453 = vector.shape_cast %452 : vector<1x8x32xf32> to vector<8x32xf32>
    %454 = vector.shape_cast %450 : vector<8x32xf32> to vector<1x8x32xf32>
    tpu.vector_store %arg4[%451, %c0_94, %c0_95], %454 {strides = array<i32>} : memref<8x8x32xf32, #tpu.memory_space<vmem>>, vector<1x8x32xf32>,
    %c5_i32 = arith.constant 5 : i32
    %455 = arith.index_cast %c5_i32 : i32 to index
    %c0_96 = arith.constant 0 : index
    %c0_97 = arith.constant 0 : index
    %456 = vector.load %arg0[%455, %c0_96, %c0_97] : memref<8x8x96xf32, #tpu.memory_space<vmem>>, vector<1x8x96xf32>
    %457 = vector.shape_cast %456 : vector<1x8x96xf32> to vector<8x96xf32>
    %458 = arith.index_cast %c5_i32 : i32 to index
    %c0_98 = arith.constant 0 : index
    %c0_99 = arith.constant 0 : index
    %459 = vector.load %arg1[%458, %c0_98, %c0_99] : memref<8x8x1xf32, #tpu.memory_space<vmem>>, vector<1x8x1xf32>
    %460 = vector.shape_cast %459 : vector<1x8x1xf32> to vector<8x1xf32>
    %cst_100 = arith.constant 0.000000e+00 : f32
    %461 = vector.broadcast %cst_100 : f32 to vector<8x1xf32>
    %462 = arith.cmpf ogt, %460, %461 : vector<8x1xf32>
    %463 = vector.extract_strided_slice %457 {offsets = [0, 0], sizes = [4, 96], strides = [1, 1]} : vector<8x96xf32> to vector<4x96xf32>
    %464 = vector.extract_strided_slice %462 {offsets = [0, 0], sizes = [4, 1], strides = [1, 1]} : vector<8x1xi1> to vector<4x1xi1>
    %cst_101 = arith.constant dense<0.000000e+00> : vector<4x96xf32>
    %465 = tpu.matmul %407, %1, %cst_101 {dimension_numbers = #tpu.dot_dimension_numbers<[1], [0], [0], [1], [0, 0, 1, 1], [], []>} : vector<4x32xf32>, vector<32x96xf32>, vector<4x96xf32> -> vector<4x96xf32>
    %466 = vector.extract_strided_slice %463 {offsets = [0, 0], sizes = [4, 32], strides = [1, 1]} : vector<4x96xf32> to vector<4x32xf32>
    %467 = vector.extract_strided_slice %465 {offsets = [0, 0], sizes = [4, 32], strides = [1, 1]} : vector<4x96xf32> to vector<4x32xf32>
    %468 = arith.addf %466, %467 : vector<4x32xf32>
    %469 = arith.negf %468 : vector<4x32xf32>
    %470 = math.exp %469 : vector<4x32xf32>
    %cst_102 = arith.constant 1.000000e+00 : f32
    %471 = vector.broadcast %cst_102 : f32 to vector<4x32xf32>
    %472 = arith.addf %471, %470 : vector<4x32xf32>
    %473 = arith.divf %471, %472 : vector<4x32xf32>
    %474 = vector.extract_strided_slice %463 {offsets = [0, 32], sizes = [4, 32], strides = [1, 1]} : vector<4x96xf32> to vector<4x32xf32>
    %475 = vector.extract_strided_slice %465 {offsets = [0, 32], sizes = [4, 32], strides = [1, 1]} : vector<4x96xf32> to vector<4x32xf32>
    %476 = arith.addf %474, %475 : vector<4x32xf32>
    %477 = arith.negf %476 : vector<4x32xf32>
    %478 = math.exp %477 : vector<4x32xf32>
    %cst_103 = arith.constant 1.000000e+00 : f32
    %479 = vector.broadcast %cst_103 : f32 to vector<4x32xf32>
    %480 = arith.addf %479, %478 : vector<4x32xf32>
    %481 = arith.divf %479, %480 : vector<4x32xf32>
    %482 = vector.extract_strided_slice %463 {offsets = [0, 64], sizes = [4, 32], strides = [1, 1]} : vector<4x96xf32> to vector<4x32xf32>
    %483 = vector.extract_strided_slice %465 {offsets = [0, 64], sizes = [4, 32], strides = [1, 1]} : vector<4x96xf32> to vector<4x32xf32>
    %484 = vector.broadcast %5 : vector<1x32xf32> to vector<4x32xf32>
    %485 = arith.addf %483, %484 : vector<4x32xf32>
    %486 = arith.mulf %473, %485 : vector<4x32xf32>
    %487 = arith.addf %482, %486 : vector<4x32xf32>
    %488 = math.tanh %487 : vector<4x32xf32>
    %cst_104 = arith.constant 1.000000e+00 : f32
    %489 = vector.broadcast %cst_104 : f32 to vector<4x32xf32>
    %490 = arith.subf %489, %481 : vector<4x32xf32>
    %491 = arith.mulf %490, %488 : vector<4x32xf32>
    %492 = arith.mulf %481, %407 : vector<4x32xf32>
    %493 = arith.addf %491, %492 : vector<4x32xf32>
    %494 = vector.shape_cast %464 : vector<4x1xi1> to vector<4x1xi1>
    %495 = vector.broadcast %494 : vector<4x1xi1> to vector<4x32xi1>
    %496 = arith.select %495, %493, %407 : vector<4x32xi1>, vector<4x32xf32>
    %cst_105 = arith.constant 0.000000e+00 : f32
    %497 = vector.shape_cast %464 : vector<4x1xi1> to vector<4x1xi1>
    %498 = vector.broadcast %497 : vector<4x1xi1> to vector<4x32xi1>
    %499 = vector.broadcast %cst_105 : f32 to vector<4x32xf32>
    %500 = arith.select %498, %496, %499 : vector<4x32xi1>, vector<4x32xf32>
    %501 = vector.extract_strided_slice %457 {offsets = [4, 0], sizes = [4, 96], strides = [1, 1]} : vector<8x96xf32> to vector<4x96xf32>
    %502 = vector.extract_strided_slice %462 {offsets = [4, 0], sizes = [4, 1], strides = [1, 1]} : vector<8x1xi1> to vector<4x1xi1>
    %cst_106 = arith.constant dense<0.000000e+00> : vector<4x96xf32>
    %503 = tpu.matmul %445, %3, %cst_106 {dimension_numbers = #tpu.dot_dimension_numbers<[1], [0], [0], [1], [0, 0, 1, 1], [], []>} : vector<4x32xf32>, vector<32x96xf32>, vector<4x96xf32> -> vector<4x96xf32>
    %504 = vector.extract_strided_slice %501 {offsets = [0, 0], sizes = [4, 32], strides = [1, 1]} : vector<4x96xf32> to vector<4x32xf32>
    %505 = vector.extract_strided_slice %503 {offsets = [0, 0], sizes = [4, 32], strides = [1, 1]} : vector<4x96xf32> to vector<4x32xf32>
    %506 = arith.addf %504, %505 : vector<4x32xf32>
    %507 = arith.negf %506 : vector<4x32xf32>
    %508 = math.exp %507 : vector<4x32xf32>
    %cst_107 = arith.constant 1.000000e+00 : f32
    %509 = vector.broadcast %cst_107 : f32 to vector<4x32xf32>
    %510 = arith.addf %509, %508 : vector<4x32xf32>
    %511 = arith.divf %509, %510 : vector<4x32xf32>
    %512 = vector.extract_strided_slice %501 {offsets = [0, 32], sizes = [4, 32], strides = [1, 1]} : vector<4x96xf32> to vector<4x32xf32>
    %513 = vector.extract_strided_slice %503 {offsets = [0, 32], sizes = [4, 32], strides = [1, 1]} : vector<4x96xf32> to vector<4x32xf32>
    %514 = arith.addf %512, %513 : vector<4x32xf32>
    %515 = arith.negf %514 : vector<4x32xf32>
    %516 = math.exp %515 : vector<4x32xf32>
    %cst_108 = arith.constant 1.000000e+00 : f32
    %517 = vector.broadcast %cst_108 : f32 to vector<4x32xf32>
    %518 = arith.addf %517, %516 : vector<4x32xf32>
    %519 = arith.divf %517, %518 : vector<4x32xf32>
    %520 = vector.extract_strided_slice %501 {offsets = [0, 64], sizes = [4, 32], strides = [1, 1]} : vector<4x96xf32> to vector<4x32xf32>
    %521 = vector.extract_strided_slice %503 {offsets = [0, 64], sizes = [4, 32], strides = [1, 1]} : vector<4x96xf32> to vector<4x32xf32>
    %522 = vector.broadcast %7 : vector<1x32xf32> to vector<4x32xf32>
    %523 = arith.addf %521, %522 : vector<4x32xf32>
    %524 = arith.mulf %511, %523 : vector<4x32xf32>
    %525 = arith.addf %520, %524 : vector<4x32xf32>
    %526 = math.tanh %525 : vector<4x32xf32>
    %cst_109 = arith.constant 1.000000e+00 : f32
    %527 = vector.broadcast %cst_109 : f32 to vector<4x32xf32>
    %528 = arith.subf %527, %519 : vector<4x32xf32>
    %529 = arith.mulf %528, %526 : vector<4x32xf32>
    %530 = arith.mulf %519, %445 : vector<4x32xf32>
    %531 = arith.addf %529, %530 : vector<4x32xf32>
    %532 = vector.shape_cast %502 : vector<4x1xi1> to vector<4x1xi1>
    %533 = vector.broadcast %532 : vector<4x1xi1> to vector<4x32xi1>
    %534 = arith.select %533, %531, %445 : vector<4x32xi1>, vector<4x32xf32>
    %cst_110 = arith.constant 0.000000e+00 : f32
    %535 = vector.shape_cast %502 : vector<4x1xi1> to vector<4x1xi1>
    %536 = vector.broadcast %535 : vector<4x1xi1> to vector<4x32xi1>
    %537 = vector.broadcast %cst_110 : f32 to vector<4x32xf32>
    %538 = arith.select %536, %534, %537 : vector<4x32xi1>, vector<4x32xf32>
    %539 = tpu.concatenate %500, %538 in 0 : vector<4x32xf32>, vector<4x32xf32> -> vector<8x32xf32>
    %540 = arith.index_cast %c5_i32 : i32 to index
    %c0_111 = arith.constant 0 : index
    %c0_112 = arith.constant 0 : index
    %541 = vector.load %arg4[%540, %c0_111, %c0_112] : memref<8x8x32xf32, #tpu.memory_space<vmem>>, vector<1x8x32xf32>
    %542 = vector.shape_cast %541 : vector<1x8x32xf32> to vector<8x32xf32>
    %543 = vector.shape_cast %539 : vector<8x32xf32> to vector<1x8x32xf32>
    tpu.vector_store %arg4[%540, %c0_111, %c0_112], %543 {strides = array<i32>} : memref<8x8x32xf32, #tpu.memory_space<vmem>>, vector<1x8x32xf32>,
    %c6_i32 = arith.constant 6 : i32
    %544 = arith.index_cast %c6_i32 : i32 to index
    %c0_113 = arith.constant 0 : index
    %c0_114 = arith.constant 0 : index
    %545 = vector.load %arg0[%544, %c0_113, %c0_114] : memref<8x8x96xf32, #tpu.memory_space<vmem>>, vector<1x8x96xf32>
    %546 = vector.shape_cast %545 : vector<1x8x96xf32> to vector<8x96xf32>
    %547 = arith.index_cast %c6_i32 : i32 to index
    %c0_115 = arith.constant 0 : index
    %c0_116 = arith.constant 0 : index
    %548 = vector.load %arg1[%547, %c0_115, %c0_116] : memref<8x8x1xf32, #tpu.memory_space<vmem>>, vector<1x8x1xf32>
    %549 = vector.shape_cast %548 : vector<1x8x1xf32> to vector<8x1xf32>
    %cst_117 = arith.constant 0.000000e+00 : f32
    %550 = vector.broadcast %cst_117 : f32 to vector<8x1xf32>
    %551 = arith.cmpf ogt, %549, %550 : vector<8x1xf32>
    %552 = vector.extract_strided_slice %546 {offsets = [0, 0], sizes = [4, 96], strides = [1, 1]} : vector<8x96xf32> to vector<4x96xf32>
    %553 = vector.extract_strided_slice %551 {offsets = [0, 0], sizes = [4, 1], strides = [1, 1]} : vector<8x1xi1> to vector<4x1xi1>
    %cst_118 = arith.constant dense<0.000000e+00> : vector<4x96xf32>
    %554 = tpu.matmul %496, %1, %cst_118 {dimension_numbers = #tpu.dot_dimension_numbers<[1], [0], [0], [1], [0, 0, 1, 1], [], []>} : vector<4x32xf32>, vector<32x96xf32>, vector<4x96xf32> -> vector<4x96xf32>
    %555 = vector.extract_strided_slice %552 {offsets = [0, 0], sizes = [4, 32], strides = [1, 1]} : vector<4x96xf32> to vector<4x32xf32>
    %556 = vector.extract_strided_slice %554 {offsets = [0, 0], sizes = [4, 32], strides = [1, 1]} : vector<4x96xf32> to vector<4x32xf32>
    %557 = arith.addf %555, %556 : vector<4x32xf32>
    %558 = arith.negf %557 : vector<4x32xf32>
    %559 = math.exp %558 : vector<4x32xf32>
    %cst_119 = arith.constant 1.000000e+00 : f32
    %560 = vector.broadcast %cst_119 : f32 to vector<4x32xf32>
    %561 = arith.addf %560, %559 : vector<4x32xf32>
    %562 = arith.divf %560, %561 : vector<4x32xf32>
    %563 = vector.extract_strided_slice %552 {offsets = [0, 32], sizes = [4, 32], strides = [1, 1]} : vector<4x96xf32> to vector<4x32xf32>
    %564 = vector.extract_strided_slice %554 {offsets = [0, 32], sizes = [4, 32], strides = [1, 1]} : vector<4x96xf32> to vector<4x32xf32>
    %565 = arith.addf %563, %564 : vector<4x32xf32>
    %566 = arith.negf %565 : vector<4x32xf32>
    %567 = math.exp %566 : vector<4x32xf32>
    %cst_120 = arith.constant 1.000000e+00 : f32
    %568 = vector.broadcast %cst_120 : f32 to vector<4x32xf32>
    %569 = arith.addf %568, %567 : vector<4x32xf32>
    %570 = arith.divf %568, %569 : vector<4x32xf32>
    %571 = vector.extract_strided_slice %552 {offsets = [0, 64], sizes = [4, 32], strides = [1, 1]} : vector<4x96xf32> to vector<4x32xf32>
    %572 = vector.extract_strided_slice %554 {offsets = [0, 64], sizes = [4, 32], strides = [1, 1]} : vector<4x96xf32> to vector<4x32xf32>
    %573 = vector.broadcast %5 : vector<1x32xf32> to vector<4x32xf32>
    %574 = arith.addf %572, %573 : vector<4x32xf32>
    %575 = arith.mulf %562, %574 : vector<4x32xf32>
    %576 = arith.addf %571, %575 : vector<4x32xf32>
    %577 = math.tanh %576 : vector<4x32xf32>
    %cst_121 = arith.constant 1.000000e+00 : f32
    %578 = vector.broadcast %cst_121 : f32 to vector<4x32xf32>
    %579 = arith.subf %578, %570 : vector<4x32xf32>
    %580 = arith.mulf %579, %577 : vector<4x32xf32>
    %581 = arith.mulf %570, %496 : vector<4x32xf32>
    %582 = arith.addf %580, %581 : vector<4x32xf32>
    %583 = vector.shape_cast %553 : vector<4x1xi1> to vector<4x1xi1>
    %584 = vector.broadcast %583 : vector<4x1xi1> to vector<4x32xi1>
    %585 = arith.select %584, %582, %496 : vector<4x32xi1>, vector<4x32xf32>
    %cst_122 = arith.constant 0.000000e+00 : f32
    %586 = vector.shape_cast %553 : vector<4x1xi1> to vector<4x1xi1>
    %587 = vector.broadcast %586 : vector<4x1xi1> to vector<4x32xi1>
    %588 = vector.broadcast %cst_122 : f32 to vector<4x32xf32>
    %589 = arith.select %587, %585, %588 : vector<4x32xi1>, vector<4x32xf32>
    %590 = vector.extract_strided_slice %546 {offsets = [4, 0], sizes = [4, 96], strides = [1, 1]} : vector<8x96xf32> to vector<4x96xf32>
    %591 = vector.extract_strided_slice %551 {offsets = [4, 0], sizes = [4, 1], strides = [1, 1]} : vector<8x1xi1> to vector<4x1xi1>
    %cst_123 = arith.constant dense<0.000000e+00> : vector<4x96xf32>
    %592 = tpu.matmul %534, %3, %cst_123 {dimension_numbers = #tpu.dot_dimension_numbers<[1], [0], [0], [1], [0, 0, 1, 1], [], []>} : vector<4x32xf32>, vector<32x96xf32>, vector<4x96xf32> -> vector<4x96xf32>
    %593 = vector.extract_strided_slice %590 {offsets = [0, 0], sizes = [4, 32], strides = [1, 1]} : vector<4x96xf32> to vector<4x32xf32>
    %594 = vector.extract_strided_slice %592 {offsets = [0, 0], sizes = [4, 32], strides = [1, 1]} : vector<4x96xf32> to vector<4x32xf32>
    %595 = arith.addf %593, %594 : vector<4x32xf32>
    %596 = arith.negf %595 : vector<4x32xf32>
    %597 = math.exp %596 : vector<4x32xf32>
    %cst_124 = arith.constant 1.000000e+00 : f32
    %598 = vector.broadcast %cst_124 : f32 to vector<4x32xf32>
    %599 = arith.addf %598, %597 : vector<4x32xf32>
    %600 = arith.divf %598, %599 : vector<4x32xf32>
    %601 = vector.extract_strided_slice %590 {offsets = [0, 32], sizes = [4, 32], strides = [1, 1]} : vector<4x96xf32> to vector<4x32xf32>
    %602 = vector.extract_strided_slice %592 {offsets = [0, 32], sizes = [4, 32], strides = [1, 1]} : vector<4x96xf32> to vector<4x32xf32>
    %603 = arith.addf %601, %602 : vector<4x32xf32>
    %604 = arith.negf %603 : vector<4x32xf32>
    %605 = math.exp %604 : vector<4x32xf32>
    %cst_125 = arith.constant 1.000000e+00 : f32
    %606 = vector.broadcast %cst_125 : f32 to vector<4x32xf32>
    %607 = arith.addf %606, %605 : vector<4x32xf32>
    %608 = arith.divf %606, %607 : vector<4x32xf32>
    %609 = vector.extract_strided_slice %590 {offsets = [0, 64], sizes = [4, 32], strides = [1, 1]} : vector<4x96xf32> to vector<4x32xf32>
    %610 = vector.extract_strided_slice %592 {offsets = [0, 64], sizes = [4, 32], strides = [1, 1]} : vector<4x96xf32> to vector<4x32xf32>
    %611 = vector.broadcast %7 : vector<1x32xf32> to vector<4x32xf32>
    %612 = arith.addf %610, %611 : vector<4x32xf32>
    %613 = arith.mulf %600, %612 : vector<4x32xf32>
    %614 = arith.addf %609, %613 : vector<4x32xf32>
    %615 = math.tanh %614 : vector<4x32xf32>
    %cst_126 = arith.constant 1.000000e+00 : f32
    %616 = vector.broadcast %cst_126 : f32 to vector<4x32xf32>
    %617 = arith.subf %616, %608 : vector<4x32xf32>
    %618 = arith.mulf %617, %615 : vector<4x32xf32>
    %619 = arith.mulf %608, %534 : vector<4x32xf32>
    %620 = arith.addf %618, %619 : vector<4x32xf32>
    %621 = vector.shape_cast %591 : vector<4x1xi1> to vector<4x1xi1>
    %622 = vector.broadcast %621 : vector<4x1xi1> to vector<4x32xi1>
    %623 = arith.select %622, %620, %534 : vector<4x32xi1>, vector<4x32xf32>
    %cst_127 = arith.constant 0.000000e+00 : f32
    %624 = vector.shape_cast %591 : vector<4x1xi1> to vector<4x1xi1>
    %625 = vector.broadcast %624 : vector<4x1xi1> to vector<4x32xi1>
    %626 = vector.broadcast %cst_127 : f32 to vector<4x32xf32>
    %627 = arith.select %625, %623, %626 : vector<4x32xi1>, vector<4x32xf32>
    %628 = tpu.concatenate %589, %627 in 0 : vector<4x32xf32>, vector<4x32xf32> -> vector<8x32xf32>
    %629 = arith.index_cast %c6_i32 : i32 to index
    %c0_128 = arith.constant 0 : index
    %c0_129 = arith.constant 0 : index
    %630 = vector.load %arg4[%629, %c0_128, %c0_129] : memref<8x8x32xf32, #tpu.memory_space<vmem>>, vector<1x8x32xf32>
    %631 = vector.shape_cast %630 : vector<1x8x32xf32> to vector<8x32xf32>
    %632 = vector.shape_cast %628 : vector<8x32xf32> to vector<1x8x32xf32>
    tpu.vector_store %arg4[%629, %c0_128, %c0_129], %632 {strides = array<i32>} : memref<8x8x32xf32, #tpu.memory_space<vmem>>, vector<1x8x32xf32>,
    %c7_i32 = arith.constant 7 : i32
    %633 = arith.index_cast %c7_i32 : i32 to index
    %c0_130 = arith.constant 0 : index
    %c0_131 = arith.constant 0 : index
    %634 = vector.load %arg0[%633, %c0_130, %c0_131] : memref<8x8x96xf32, #tpu.memory_space<vmem>>, vector<1x8x96xf32>
    %635 = vector.shape_cast %634 : vector<1x8x96xf32> to vector<8x96xf32>
    %636 = arith.index_cast %c7_i32 : i32 to index
    %c0_132 = arith.constant 0 : index
    %c0_133 = arith.constant 0 : index
    %637 = vector.load %arg1[%636, %c0_132, %c0_133] : memref<8x8x1xf32, #tpu.memory_space<vmem>>, vector<1x8x1xf32>
    %638 = vector.shape_cast %637 : vector<1x8x1xf32> to vector<8x1xf32>
    %cst_134 = arith.constant 0.000000e+00 : f32
    %639 = vector.broadcast %cst_134 : f32 to vector<8x1xf32>
    %640 = arith.cmpf ogt, %638, %639 : vector<8x1xf32>
    %641 = vector.extract_strided_slice %635 {offsets = [0, 0], sizes = [4, 96], strides = [1, 1]} : vector<8x96xf32> to vector<4x96xf32>
    %642 = vector.extract_strided_slice %640 {offsets = [0, 0], sizes = [4, 1], strides = [1, 1]} : vector<8x1xi1> to vector<4x1xi1>
    %cst_135 = arith.constant dense<0.000000e+00> : vector<4x96xf32>
    %643 = tpu.matmul %585, %1, %cst_135 {dimension_numbers = #tpu.dot_dimension_numbers<[1], [0], [0], [1], [0, 0, 1, 1], [], []>} : vector<4x32xf32>, vector<32x96xf32>, vector<4x96xf32> -> vector<4x96xf32>
    %644 = vector.extract_strided_slice %641 {offsets = [0, 0], sizes = [4, 32], strides = [1, 1]} : vector<4x96xf32> to vector<4x32xf32>
    %645 = vector.extract_strided_slice %643 {offsets = [0, 0], sizes = [4, 32], strides = [1, 1]} : vector<4x96xf32> to vector<4x32xf32>
    %646 = arith.addf %644, %645 : vector<4x32xf32>
    %647 = arith.negf %646 : vector<4x32xf32>
    %648 = math.exp %647 : vector<4x32xf32>
    %cst_136 = arith.constant 1.000000e+00 : f32
    %649 = vector.broadcast %cst_136 : f32 to vector<4x32xf32>
    %650 = arith.addf %649, %648 : vector<4x32xf32>
    %651 = arith.divf %649, %650 : vector<4x32xf32>
    %652 = vector.extract_strided_slice %641 {offsets = [0, 32], sizes = [4, 32], strides = [1, 1]} : vector<4x96xf32> to vector<4x32xf32>
    %653 = vector.extract_strided_slice %643 {offsets = [0, 32], sizes = [4, 32], strides = [1, 1]} : vector<4x96xf32> to vector<4x32xf32>
    %654 = arith.addf %652, %653 : vector<4x32xf32>
    %655 = arith.negf %654 : vector<4x32xf32>
    %656 = math.exp %655 : vector<4x32xf32>
    %cst_137 = arith.constant 1.000000e+00 : f32
    %657 = vector.broadcast %cst_137 : f32 to vector<4x32xf32>
    %658 = arith.addf %657, %656 : vector<4x32xf32>
    %659 = arith.divf %657, %658 : vector<4x32xf32>
    %660 = vector.extract_strided_slice %641 {offsets = [0, 64], sizes = [4, 32], strides = [1, 1]} : vector<4x96xf32> to vector<4x32xf32>
    %661 = vector.extract_strided_slice %643 {offsets = [0, 64], sizes = [4, 32], strides = [1, 1]} : vector<4x96xf32> to vector<4x32xf32>
    %662 = vector.broadcast %5 : vector<1x32xf32> to vector<4x32xf32>
    %663 = arith.addf %661, %662 : vector<4x32xf32>
    %664 = arith.mulf %651, %663 : vector<4x32xf32>
    %665 = arith.addf %660, %664 : vector<4x32xf32>
    %666 = math.tanh %665 : vector<4x32xf32>
    %cst_138 = arith.constant 1.000000e+00 : f32
    %667 = vector.broadcast %cst_138 : f32 to vector<4x32xf32>
    %668 = arith.subf %667, %659 : vector<4x32xf32>
    %669 = arith.mulf %668, %666 : vector<4x32xf32>
    %670 = arith.mulf %659, %585 : vector<4x32xf32>
    %671 = arith.addf %669, %670 : vector<4x32xf32>
    %672 = vector.shape_cast %642 : vector<4x1xi1> to vector<4x1xi1>
    %673 = vector.broadcast %672 : vector<4x1xi1> to vector<4x32xi1>
    %674 = arith.select %673, %671, %585 : vector<4x32xi1>, vector<4x32xf32>
    %cst_139 = arith.constant 0.000000e+00 : f32
    %675 = vector.shape_cast %642 : vector<4x1xi1> to vector<4x1xi1>
    %676 = vector.broadcast %675 : vector<4x1xi1> to vector<4x32xi1>
    %677 = vector.broadcast %cst_139 : f32 to vector<4x32xf32>
    %678 = arith.select %676, %674, %677 : vector<4x32xi1>, vector<4x32xf32>
    %679 = vector.extract_strided_slice %635 {offsets = [4, 0], sizes = [4, 96], strides = [1, 1]} : vector<8x96xf32> to vector<4x96xf32>
    %680 = vector.extract_strided_slice %640 {offsets = [4, 0], sizes = [4, 1], strides = [1, 1]} : vector<8x1xi1> to vector<4x1xi1>
    %cst_140 = arith.constant dense<0.000000e+00> : vector<4x96xf32>
    %681 = tpu.matmul %623, %3, %cst_140 {dimension_numbers = #tpu.dot_dimension_numbers<[1], [0], [0], [1], [0, 0, 1, 1], [], []>} : vector<4x32xf32>, vector<32x96xf32>, vector<4x96xf32> -> vector<4x96xf32>
    %682 = vector.extract_strided_slice %679 {offsets = [0, 0], sizes = [4, 32], strides = [1, 1]} : vector<4x96xf32> to vector<4x32xf32>
    %683 = vector.extract_strided_slice %681 {offsets = [0, 0], sizes = [4, 32], strides = [1, 1]} : vector<4x96xf32> to vector<4x32xf32>
    %684 = arith.addf %682, %683 : vector<4x32xf32>
    %685 = arith.negf %684 : vector<4x32xf32>
    %686 = math.exp %685 : vector<4x32xf32>
    %cst_141 = arith.constant 1.000000e+00 : f32
    %687 = vector.broadcast %cst_141 : f32 to vector<4x32xf32>
    %688 = arith.addf %687, %686 : vector<4x32xf32>
    %689 = arith.divf %687, %688 : vector<4x32xf32>
    %690 = vector.extract_strided_slice %679 {offsets = [0, 32], sizes = [4, 32], strides = [1, 1]} : vector<4x96xf32> to vector<4x32xf32>
    %691 = vector.extract_strided_slice %681 {offsets = [0, 32], sizes = [4, 32], strides = [1, 1]} : vector<4x96xf32> to vector<4x32xf32>
    %692 = arith.addf %690, %691 : vector<4x32xf32>
    %693 = arith.negf %692 : vector<4x32xf32>
    %694 = math.exp %693 : vector<4x32xf32>
    %cst_142 = arith.constant 1.000000e+00 : f32
    %695 = vector.broadcast %cst_142 : f32 to vector<4x32xf32>
    %696 = arith.addf %695, %694 : vector<4x32xf32>
    %697 = arith.divf %695, %696 : vector<4x32xf32>
    %698 = vector.extract_strided_slice %679 {offsets = [0, 64], sizes = [4, 32], strides = [1, 1]} : vector<4x96xf32> to vector<4x32xf32>
    %699 = vector.extract_strided_slice %681 {offsets = [0, 64], sizes = [4, 32], strides = [1, 1]} : vector<4x96xf32> to vector<4x32xf32>
    %700 = vector.broadcast %7 : vector<1x32xf32> to vector<4x32xf32>
    %701 = arith.addf %699, %700 : vector<4x32xf32>
    %702 = arith.mulf %689, %701 : vector<4x32xf32>
    %703 = arith.addf %698, %702 : vector<4x32xf32>
    %704 = math.tanh %703 : vector<4x32xf32>
    %cst_143 = arith.constant 1.000000e+00 : f32
    %705 = vector.broadcast %cst_143 : f32 to vector<4x32xf32>
    %706 = arith.subf %705, %697 : vector<4x32xf32>
    %707 = arith.mulf %706, %704 : vector<4x32xf32>
    %708 = arith.mulf %697, %623 : vector<4x32xf32>
    %709 = arith.addf %707, %708 : vector<4x32xf32>
    %710 = vector.shape_cast %680 : vector<4x1xi1> to vector<4x1xi1>
    %711 = vector.broadcast %710 : vector<4x1xi1> to vector<4x32xi1>
    %712 = arith.select %711, %709, %623 : vector<4x32xi1>, vector<4x32xf32>
    %cst_144 = arith.constant 0.000000e+00 : f32
    %713 = vector.shape_cast %680 : vector<4x1xi1> to vector<4x1xi1>
    %714 = vector.broadcast %713 : vector<4x1xi1> to vector<4x32xi1>
    %715 = vector.broadcast %cst_144 : f32 to vector<4x32xf32>
    %716 = arith.select %714, %712, %715 : vector<4x32xi1>, vector<4x32xf32>
    %717 = tpu.concatenate %678, %716 in 0 : vector<4x32xf32>, vector<4x32xf32> -> vector<8x32xf32>
    %718 = arith.index_cast %c7_i32 : i32 to index
    %c0_145 = arith.constant 0 : index
    %c0_146 = arith.constant 0 : index
    %719 = vector.load %arg4[%718, %c0_145, %c0_146] : memref<8x8x32xf32, #tpu.memory_space<vmem>>, vector<1x8x32xf32>
    %720 = vector.shape_cast %719 : vector<1x8x32xf32> to vector<8x32xf32>
    %721 = vector.shape_cast %717 : vector<8x32xf32> to vector<1x8x32xf32>
    tpu.vector_store %arg4[%718, %c0_145, %c0_146], %721 {strides = array<i32>} : memref<8x8x32xf32, #tpu.memory_space<vmem>>, vector<1x8x32xf32>,
    %c8_i32 = arith.constant 8 : i32
    %722 = tpu.concatenate %674, %712 in 0 : vector<4x32xf32>, vector<4x32xf32> -> vector<8x32xf32>
    %c0_147 = arith.constant 0 : index
    %c0_148 = arith.constant 0 : index
    %723 = vector.load %arg5[%c0_147, %c0_148] : memref<8x32xf32, #tpu.memory_space<vmem>>, vector<8x32xf32>
    tpu.vector_store %arg5[%c0_147, %c0_148], %722 {strides = array<i32>} : memref<8x32xf32, #tpu.memory_space<vmem>>, vector<8x32xf32>,
    return
  }
}

</mosaic_0001>

<llo_original>
// kernel: tpu_custom_call.1
$region0: #{tpu_custom_call.1}
  #allocation0 [shape = 'u32[]', space=smem, size = 0x4, offset = 0x4, fixed_abs, tag = 'smem constant byte address 0x4 - core index']
  #allocation1 [shape = 'u32[72,128]{1,0:T(1,128)}', space=vmem, size = 0x9000, scoped, tag = 'internal scratch']
  %s0 = inlined_call_operand.vmem [shape: f32[8,8,96], index: 0, kind: input, shape index: {}]
  %s1 = inlined_call_operand.vmem [shape: f32[8,8,1], index: 1, kind: input, shape index: {}]
  %s2 = inlined_call_operand.hbm [shape: f32[2,32,96], index: 2, kind: input, shape index: {}]
  %s3 = inlined_call_operand.vmem [shape: f32[2,1,32], index: 3, kind: input, shape index: {}]
  %s4 = inlined_call_operand.hbm [shape: f32[8,8,32], index: 4, kind: output, shape index: {0}]
  %s5 = inlined_call_operand.hbm [shape: f32[8,32], index: 5, kind: output, shape index: {1}]
  %6 = xla_tuple %s4, %s5
  %s7 = sld [smem:[#allocation0]]
  $region38: #{tpu_custom_call.1} parent=0
    _
  %s9 = ssub.s32 1, %s7
  %s10 = scalar_select 0, %s9, %s7
  $region1: #{tpu_custom_call.1} parent=0
    #allocation2 [shape = 'u8[32768]{0}', space=vmem, size = 0x8000, scoped, tag = 'input window, operand 2, single buffered']
    #allocation3 [shape = 's32[1]{0}', space=sflag, size = 0x4, scoped, tag = 'scoped memory for tpu_custom_call.1']
    #allocation4 [shape = 's32[1]{0}', space=sflag, size = 0x4, scoped, tag = 'scoped memory for tpu_custom_call.1']
    #allocation5 [shape = 'u8[32768]{0}', space=vmem, size = 0x8000, scoped, tag = 'output window, operand 0, single buffered']
    #allocation6 [shape = 'u8[4096]{0}', space=vmem, size = 0x1000, scoped, tag = 'output window, operand 1, single buffered']
    #allocation7 [shape = 's32[1]{0}', space=sflag, size = 0x4, scoped, tag = 'scoped memory for tpu_custom_call.1']
    %11 = vsyncpa [#allocation3], 0
    %12 = vsyncpa [#allocation4], 0
    %13 = vsyncpa [#allocation7], 0
    // Predicated region
    $region2: #{tpu_custom_call.1} parent=1 // pred_check
      _
    $region3: #{tpu_custom_call.1} parent=1 // pred_check_branch
      %15 = sbr.rel (0) target = $region5
    $region4: #{tpu_custom_call.1} parent=1 // pred_region
      _
    $region5: #{tpu_custom_call.1} parent=1 // pred_fallthru
      _
    // Predicated region
    $region6: #{tpu_custom_call.1} parent=1 // pred_check
      _
    $region7: #{tpu_custom_call.1} parent=1 // pred_check_branch
      %17 = sbr.rel (0) target = $region9
    $region8: #{tpu_custom_call.1} parent=1 // pred_region
      _
    $region9: #{tpu_custom_call.1} parent=1 // pred_fallthru
      _
    // Predicated region
    $region10: #{tpu_custom_call.1} parent=1 // pred_check
      _
    $region11: #{tpu_custom_call.1} parent=1 // pred_check_branch
      %19 = sbr.rel (0) target = $region13
    $region12: #{tpu_custom_call.1} parent=1 // pred_region
      %21 = vsyncadd [#allocation3], 0
      %s22 = sshll.u32 %s2, 4
      %s23 = int_to_ptr.hbm [resolvable:$true] %s22
      %s24 = sshll.u32 [#allocation2], 4
      %s25 = int_to_ptr.vmem [resolvable:$true] %s24
      %30 = dma.hbm_to_vmem [thread:$0]  %s23, 1024, %s25, [#allocation3], 128, 128, 8
    $region13: #{tpu_custom_call.1} parent=1 // pred_fallthru
      _
    // Predicated region
    $region14: #{tpu_custom_call.1} parent=1 // pred_check
      _
    $region15: #{tpu_custom_call.1} parent=1 // pred_check_branch
      %32 = sbr.rel (0) target = $region17
    $region16: #{tpu_custom_call.1} parent=1 // pred_region
      _
    $region17: #{tpu_custom_call.1} parent=1 // pred_fallthru
      _
    // Predicated region
    $region18: #{tpu_custom_call.1} parent=1 // pred_check
      _
    $region19: #{tpu_custom_call.1} parent=1 // pred_check_branch
      %34 = sbr.rel (0) target = $region21
    $region20: #{tpu_custom_call.1} parent=1 // pred_region
      %36 = dma.done [#allocation3], 1024
    $region21: #{tpu_custom_call.1} parent=1 // pred_fallthru
      _
    %v37 = vld [vmem:[#allocation2] sm:$0xff]
    %v38 = vld [vmem:[#allocation2 + $0x8] sm:$0xff]
    %v39 = vld [vmem:[#allocation2 + $0x10] sm:$0xff]
    %v40 = vld [vmem:[#allocation2 + $0x18] sm:$0xff]
    %s41 = scalar_lea.vmem [#allocation2], 32
    %v42 = vld [vmem:[%s41] sm:$0xff]
    %v43 = vld [vmem:[%s41 + $0x8] sm:$0xff]
    %v44 = vld [vmem:[%s41 + $0x10] sm:$0xff]
    %v45 = vld [vmem:[%s41 + $0x18] sm:$0xff]
    %v46 = vld [vmem:[%s3] sm:$0x1]
    %s47 = scalar_lea.vmem %s3, 1
    %v48 = vld [vmem:[%s47] sm:$0x1]
    %v49 = vld [vmem:[%s0] sm:$0xff]
    %v50 = vld [vmem:[%s1] sm:$0xff]
    %vm51 = vcmp.gt.f32.partialorder %v50, 0.0
    %vm52 = vcmask 261120
    %v54 = vsel %vm52, 0.0, 0
    %56 = vmatpush.msra.mxu0 0.0
    %57 = vmatpush.msra.mxu0 0.0
    %58 = vmatpush.msra.mxu0 0.0
    %59 = vmatpush.msra.mxu0 0.0
    %60 = vmatpush.msra.mxu0 0.0
    %61 = vmatpush.msra.mxu0 0.0
    %62 = vmatpush.msra.mxu0 0.0
    %63 = vmatpush.msra.mxu0 0.0
    %64 = vmatpush.msra.mxu0 0.0
    %65 = vmatpush.msra.mxu0 0.0
    %66 = vmatpush.msra.mxu0 0.0
    %67 = vmatpush.msra.mxu0 0.0
    %68 = vmatpush.msra.mxu0 %v40
    %69 = vmatpush.msra.mxu0 %v39
    %70 = vmatpush.msra.mxu0 %v38
    %71 = vmatpush.msra.mxu0 %v37
    %72 = vmatmul.f32.gmra.mxu0 %v54
    %v73 = vpop.f32.mrf.mxu0
    %v74 = vadd.f32 0.0, %v73
    %75 = vdwg.mxu0
    %v76 = vadd.f32 %v49, %v74
    %v77 = vxor.u32 %v76, 2147483648
    %v78 = vmul.f32 %v77, 1.442695
    %v79 = vpow.pop %v78
    %v80 = vadd.f32 %v79, 1.0
    %v81 = vrcp.pop %v80
    %v82 = vmul.f32 %v80, %v81
    %v83 = vsub.f32 1.0, %v82
    %v84 = vmul.f32 %v81, %v83
    %v85 = vadd.f32 %v81, %v84
    %vm86 = vweird.f32 %v80
    %vm87 = vweird.f32 %v81
    %vm88 = vmor %vm86, %vm87
    %v89 = vsel %vm88, %v81, %v85
    %v90 = vand.u32 2147483647, %v80
    %vm91 = vcmp.eq.f32.partialorder %v90, 8.507059e+37
    %v92 = vand.u32 %v80, 2147483648
    %v93 = vor.u32 1.1754944e-38, %v92
    %v94 = vsel %vm91, %v93, %v89
    %v95 = vmul.f32 1.0, %v94
    %v97 = vperm.slane %v46, 0
    %98 = vrot.lane.b32.xlu0 %v97, 64
    %v99 = vpop.permute.xlu0 %98
    %v101 = vadd.f32 %v74, %v99
    %103 = vrot.lane.b32.xlu0 %v101, 64
    %v104 = vpop.permute.xlu0 %103
    %v106 = vmul.f32 %v95, %v104
    %108 = vrot.lane.b32.xlu0 %v106, 64
    %v109 = vpop.permute.xlu0 %108
    %v111 = vadd.f32 %v49, %v109
    %v112 = vtanh.pop %v111
    %v113 = vsub.f32 1.0, %v95
    %115 = vrot.lane.b32.xlu0 %v112, 96
    %v116 = vpop.permute.xlu0 %115
    %v118 = vmul.f32 %v113, %v116
    %v119 = vmul.f32 %v95, 0.0
    %v120 = vadd.f32 %v118, %v119
    %v121 = vsel %vm51, 1, 0
    %122 = vset.pattern.permute.xlu0 0
    %123 = vperm.xlu0 %122, %v121
    %v124 = vpop.permute.xlu0 %123
    %vm125 = vcmp.eq.s32.totalorder %v124, 1
    %v126 = vsel %vm125, %v120, 0.0
    %127 = vmatpush.msra.mxu0 0.0
    %128 = vmatpush.msra.mxu0 0.0
    %129 = vmatpush.msra.mxu0 0.0
    %130 = vmatpush.msra.mxu0 0.0
    %131 = vmatpush.msra.mxu0 0.0
    %132 = vmatpush.msra.mxu0 0.0
    %133 = vmatpush.msra.mxu0 0.0
    %134 = vmatpush.msra.mxu0 0.0
    %135 = vmatpush.msra.mxu0 0.0
    %136 = vmatpush.msra.mxu0 0.0
    %137 = vmatpush.msra.mxu0 0.0
    %138 = vmatpush.msra.mxu0 0.0
    %139 = vmatpush.msra.mxu0 %v45
    %140 = vmatpush.msra.mxu0 %v44
    %141 = vmatpush.msra.mxu0 %v43
    %142 = vmatpush.msra.mxu0 %v42
    %143 = vmatmul.f32.gmra.mxu0 %v54
    %v144 = vpop.f32.mrf.mxu0
    %v145 = vadd.f32 0.0, %v144
    %146 = vdwg.mxu0
    %v148 = vrot.slane %v145, 4
    %v150 = vadd.f32 %v49, %v148
    %v151 = vxor.u32 %v150, 2147483648
    %v152 = vmul.f32 %v151, 1.442695
    %v153 = vpow.pop %v152
    %v154 = vadd.f32 %v153, 1.0
    %v155 = vrcp.pop %v154
    %v156 = vmul.f32 %v154, %v155
    %v157 = vsub.f32 1.0, %v156
    %v158 = vmul.f32 %v155, %v157
    %v159 = vadd.f32 %v155, %v158
    %vm160 = vweird.f32 %v154
    %vm161 = vweird.f32 %v155
    %vm162 = vmor %vm160, %vm161
    %v163 = vsel %vm162, %v155, %v159
    %v164 = vand.u32 2147483647, %v154
    %vm165 = vcmp.eq.f32.partialorder %v164, 8.507059e+37
    %v166 = vand.u32 %v154, 2147483648
    %v167 = vor.u32 1.1754944e-38, %v166
    %v168 = vsel %vm165, %v167, %v163
    %v169 = vmul.f32 1.0, %v168
    %v171 = vperm.slane %v48, 0
    %172 = vrot.lane.b32.xlu0 %v171, 64
    %v173 = vpop.permute.xlu0 %172
    %v175 = vadd.f32 %v145, %v173
    %v177 = vrot.slane %v175, 4
    %178 = vrot.lane.b32.xlu0 %v177, 64
    %v179 = vpop.permute.xlu0 %178
    %v181 = vmul.f32 %v169, %v179
    %183 = vrot.lane.b32.xlu0 %v181, 64
    %v184 = vpop.permute.xlu0 %183
    %v186 = vadd.f32 %v49, %v184
    %v187 = vtanh.pop %v186
    %v188 = vsub.f32 1.0, %v169
    %190 = vrot.lane.b32.xlu0 %v187, 96
    %v191 = vpop.permute.xlu0 %190
    %v193 = vmul.f32 %v188, %v191
    %v194 = vmul.f32 %v169, 0.0
    %v195 = vadd.f32 %v193, %v194
    %v196 = vsel %vm125, %v195, 0.0
    %vm197 = vcmask 1043456
    %v198 = vsel %vm197, %v126, %v196
    %200 = vrot.lane.b32.xlu0 %v198, 96
    %v201 = vpop.permute.xlu0 %200
    %203 = vst.msk [vmem:[#allocation5] sm:$0xff] %vm52, %v201
    %s204 = scalar_lea.vmem %s0, 8
    %v205 = vld [vmem:[%s204] sm:$0xff]
    %s206 = scalar_lea.vmem %s1, 8
    %v207 = vld [vmem:[%s206] sm:$0xff]
    %vm208 = vcmp.gt.f32.partialorder %v207, 0.0
    %210 = vrot.lane.b32.xlu0 %v126, 96
    %v211 = vpop.permute.xlu0 %210
    %v212 = vsel %vm52, %v211, 0
    %214 = vmatpush.msra.mxu0 0.0
    %215 = vmatpush.msra.mxu0 0.0
    %216 = vmatpush.msra.mxu0 0.0
    %217 = vmatpush.msra.mxu0 0.0
    %218 = vmatpush.msra.mxu0 0.0
    %219 = vmatpush.msra.mxu0 0.0
    %220 = vmatpush.msra.mxu0 0.0
    %221 = vmatpush.msra.mxu0 0.0
    %222 = vmatpush.msra.mxu0 0.0
    %223 = vmatpush.msra.mxu0 0.0
    %224 = vmatpush.msra.mxu0 0.0
    %225 = vmatpush.msra.mxu0 0.0
    %226 = vmatpush.msra.mxu0 %v40
    %227 = vmatpush.msra.mxu0 %v39
    %228 = vmatpush.msra.mxu0 %v38
    %229 = vmatpush.msra.mxu0 %v37
    %230 = vmatmul.f32.gmra.mxu0 %v212
    %v231 = vpop.f32.mrf.mxu0
    %v232 = vadd.f32 0.0, %v231
    %233 = vdwg.mxu0
    %v234 = vadd.f32 %v205, %v232
    %v235 = vxor.u32 %v234, 2147483648
    %v236 = vmul.f32 %v235, 1.442695
    %v237 = vpow.pop %v236
    %v238 = vadd.f32 %v237, 1.0
    %v239 = vrcp.pop %v238
    %v240 = vmul.f32 %v238, %v239
    %v241 = vsub.f32 1.0, %v240
    %v242 = vmul.f32 %v239, %v241
    %v243 = vadd.f32 %v239, %v242
    %vm244 = vweird.f32 %v238
    %vm245 = vweird.f32 %v239
    %vm246 = vmor %vm244, %vm245
    %v247 = vsel %vm246, %v239, %v243
    %v248 = vand.u32 2147483647, %v238
    %vm249 = vcmp.eq.f32.partialorder %v248, 8.507059e+37
    %v250 = vand.u32 %v238, 2147483648
    %v251 = vor.u32 1.1754944e-38, %v250
    %v252 = vsel %vm249, %v251, %v247
    %v253 = vmul.f32 1.0, %v252
    %v254 = vadd.f32 %v232, %v99
    %256 = vrot.lane.b32.xlu0 %v254, 64
    %v257 = vpop.permute.xlu0 %256
    %v259 = vmul.f32 %v253, %v257
    %261 = vrot.lane.b32.xlu0 %v259, 64
    %v262 = vpop.permute.xlu0 %261
    %v264 = vadd.f32 %v205, %v262
    %v265 = vtanh.pop %v264
    %v266 = vsub.f32 1.0, %v253
    %268 = vrot.lane.b32.xlu0 %v265, 96
    %v269 = vpop.permute.xlu0 %268
    %v271 = vmul.f32 %v266, %v269
    %v272 = vmul.f32 %v253, %v126
    %v273 = vadd.f32 %v271, %v272
    %v274 = vsel %vm208, 1, 0
    %275 = vset.pattern.permute.xlu0 0
    %276 = vperm.xlu0 %275, %v274
    %v277 = vpop.permute.xlu0 %276
    %vm278 = vcmp.eq.s32.totalorder %v277, 1
    %v279 = vsel %vm278, %v273, %v126
    %v280 = vsel %vm278, %v273, 0.0
    %v282 = vrot.slane %v196, 4
    %283 = vrot.lane.b32.xlu0 %v282, 96
    %v284 = vpop.permute.xlu0 %283
    %v285 = vsel %vm52, %v284, 0
    %287 = vmatpush.msra.mxu0 0.0
    %288 = vmatpush.msra.mxu0 0.0
    %289 = vmatpush.msra.mxu0 0.0
    %290 = vmatpush.msra.mxu0 0.0
    %291 = vmatpush.msra.mxu0 0.0
    %292 = vmatpush.msra.mxu0 0.0
    %293 = vmatpush.msra.mxu0 0.0
    %294 = vmatpush.msra.mxu0 0.0
    %295 = vmatpush.msra.mxu0 0.0
    %296 = vmatpush.msra.mxu0 0.0
    %297 = vmatpush.msra.mxu0 0.0
    %298 = vmatpush.msra.mxu0 0.0
    %299 = vmatpush.msra.mxu0 %v45
    %300 = vmatpush.msra.mxu0 %v44
    %301 = vmatpush.msra.mxu0 %v43
    %302 = vmatpush.msra.mxu0 %v42
    %303 = vmatmul.f32.gmra.mxu0 %v285
    %v304 = vpop.f32.mrf.mxu0
    %v305 = vadd.f32 0.0, %v304
    %306 = vdwg.mxu0
    %v308 = vrot.slane %v305, 4
    %v310 = vadd.f32 %v205, %v308
    %v311 = vxor.u32 %v310, 2147483648
    %v312 = vmul.f32 %v311, 1.442695
    %v313 = vpow.pop %v312
    %v314 = vadd.f32 %v313, 1.0
    %v315 = vrcp.pop %v314
    %v316 = vmul.f32 %v314, %v315
    %v317 = vsub.f32 1.0, %v316
    %v318 = vmul.f32 %v315, %v317
    %v319 = vadd.f32 %v315, %v318
    %vm320 = vweird.f32 %v314
    %vm321 = vweird.f32 %v315
    %vm322 = vmor %vm320, %vm321
    %v323 = vsel %vm322, %v315, %v319
    %v324 = vand.u32 2147483647, %v314
    %vm325 = vcmp.eq.f32.partialorder %v324, 8.507059e+37
    %v326 = vand.u32 %v314, 2147483648
    %v327 = vor.u32 1.1754944e-38, %v326
    %v328 = vsel %vm325, %v327, %v323
    %v329 = vmul.f32 1.0, %v328
    %v330 = vadd.f32 %v305, %v173
    %v332 = vrot.slane %v330, 4
    %333 = vrot.lane.b32.xlu0 %v332, 64
    %v334 = vpop.permute.xlu0 %333
    %v336 = vmul.f32 %v329, %v334
    %338 = vrot.lane.b32.xlu0 %v336, 64
    %v339 = vpop.permute.xlu0 %338
    %v341 = vadd.f32 %v205, %v339
    %v342 = vtanh.pop %v341
    %v343 = vsub.f32 1.0, %v329
    %345 = vrot.lane.b32.xlu0 %v342, 96
    %v346 = vpop.permute.xlu0 %345
    %v348 = vmul.f32 %v343, %v346
    %v349 = vmul.f32 %v329, %v196
    %v350 = vadd.f32 %v348, %v349
    %v351 = vsel %vm278, %v350, %v196
    %v352 = vsel %vm278, %v350, 0.0
    %v353 = vsel %vm197, %v280, %v352
    %355 = vrot.lane.b32.xlu0 %v353, 96
    %v356 = vpop.permute.xlu0 %355
    %s358 = scalar_lea.vmem [#allocation5], 8
    %359 = vst.msk [vmem:[%s358] sm:$0xff] %vm52, %v356
    %s360 = scalar_lea.vmem %s0, 16
    %v361 = vld [vmem:[%s360] sm:$0xff]
    %s362 = scalar_lea.vmem %s1, 16
    %v363 = vld [vmem:[%s362] sm:$0xff]
    %vm364 = vcmp.gt.f32.partialorder %v363, 0.0
    %366 = vrot.lane.b32.xlu0 %v279, 96
    %v367 = vpop.permute.xlu0 %366
    %v368 = vsel %vm52, %v367, 0
    %370 = vmatpush.msra.mxu0 0.0
    %371 = vmatpush.msra.mxu0 0.0
    %372 = vmatpush.msra.mxu0 0.0
    %373 = vmatpush.msra.mxu0 0.0
    %374 = vmatpush.msra.mxu0 0.0
    %375 = vmatpush.msra.mxu0 0.0
    %376 = vmatpush.msra.mxu0 0.0
    %377 = vmatpush.msra.mxu0 0.0
    %378 = vmatpush.msra.mxu0 0.0
    %379 = vmatpush.msra.mxu0 0.0
    %380 = vmatpush.msra.mxu0 0.0
    %381 = vmatpush.msra.mxu0 0.0
    %382 = vmatpush.msra.mxu0 %v40
    %383 = vmatpush.msra.mxu0 %v39
    %384 = vmatpush.msra.mxu0 %v38
    %385 = vmatpush.msra.mxu0 %v37
    %386 = vmatmul.f32.gmra.mxu0 %v368
    %v387 = vpop.f32.mrf.mxu0
    %v388 = vadd.f32 0.0, %v387
    %389 = vdwg.mxu0
    %v390 = vadd.f32 %v361, %v388
    %v391 = vxor.u32 %v390, 2147483648
    %v392 = vmul.f32 %v391, 1.442695
    %v393 = vpow.pop %v392
    %v394 = vadd.f32 %v393, 1.0
    %v395 = vrcp.pop %v394
    %v396 = vmul.f32 %v394, %v395
    %v397 = vsub.f32 1.0, %v396
    %v398 = vmul.f32 %v395, %v397
    %v399 = vadd.f32 %v395, %v398
    %vm400 = vweird.f32 %v394
    %vm401 = vweird.f32 %v395
    %vm402 = vmor %vm400, %vm401
    %v403 = vsel %vm402, %v395, %v399
    %v404 = vand.u32 2147483647, %v394
    %vm405 = vcmp.eq.f32.partialorder %v404, 8.507059e+37
    %v406 = vand.u32 %v394, 2147483648
    %v407 = vor.u32 1.1754944e-38, %v406
    %v408 = vsel %vm405, %v407, %v403
    %v409 = vmul.f32 1.0, %v408
    %v410 = vadd.f32 %v388, %v99
    %412 = vrot.lane.b32.xlu0 %v410, 64
    %v413 = vpop.permute.xlu0 %412
    %v415 = vmul.f32 %v409, %v413
    %417 = vrot.lane.b32.xlu0 %v415, 64
    %v418 = vpop.permute.xlu0 %417
    %v420 = vadd.f32 %v361, %v418
    %v421 = vtanh.pop %v420
    %v422 = vsub.f32 1.0, %v409
    %424 = vrot.lane.b32.xlu0 %v421, 96
    %v425 = vpop.permute.xlu0 %424
    %v427 = vmul.f32 %v422, %v425
    %v428 = vmul.f32 %v409, %v279
    %v429 = vadd.f32 %v427, %v428
    %v430 = vsel %vm364, 1, 0
    %431 = vset.pattern.permute.xlu0 0
    %432 = vperm.xlu0 %431, %v430
    %v433 = vpop.permute.xlu0 %432
    %vm434 = vcmp.eq.s32.totalorder %v433, 1
    %v435 = vsel %vm434, %v429, %v279
    %v436 = vsel %vm434, %v429, 0.0
    %v438 = vrot.slane %v351, 4
    %439 = vrot.lane.b32.xlu0 %v438, 96
    %v440 = vpop.permute.xlu0 %439
    %v441 = vsel %vm52, %v440, 0
    %443 = vmatpush.msra.mxu0 0.0
    %444 = vmatpush.msra.mxu0 0.0
    %445 = vmatpush.msra.mxu0 0.0
    %446 = vmatpush.msra.mxu0 0.0
    %447 = vmatpush.msra.mxu0 0.0
    %448 = vmatpush.msra.mxu0 0.0
    %449 = vmatpush.msra.mxu0 0.0
    %450 = vmatpush.msra.mxu0 0.0
    %451 = vmatpush.msra.mxu0 0.0
    %452 = vmatpush.msra.mxu0 0.0
    %453 = vmatpush.msra.mxu0 0.0
    %454 = vmatpush.msra.mxu0 0.0
    %455 = vmatpush.msra.mxu0 %v45
    %456 = vmatpush.msra.mxu0 %v44
    %457 = vmatpush.msra.mxu0 %v43
    %458 = vmatpush.msra.mxu0 %v42
    %459 = vmatmul.f32.gmra.mxu0 %v441
    %v460 = vpop.f32.mrf.mxu0
    %v461 = vadd.f32 0.0, %v460
    %462 = vdwg.mxu0
    %v464 = vrot.slane %v461, 4
    %v466 = vadd.f32 %v361, %v464
    %v467 = vxor.u32 %v466, 2147483648
    %v468 = vmul.f32 %v467, 1.442695
    %v469 = vpow.pop %v468
    %v470 = vadd.f32 %v469, 1.0
    %v471 = vrcp.pop %v470
    %v472 = vmul.f32 %v470, %v471
    %v473 = vsub.f32 1.0, %v472
    %v474 = vmul.f32 %v471, %v473
    %v475 = vadd.f32 %v471, %v474
    %vm476 = vweird.f32 %v470
    %vm477 = vweird.f32 %v471
    %vm478 = vmor %vm476, %vm477
    %v479 = vsel %vm478, %v471, %v475
    %v480 = vand.u32 2147483647, %v470
    %vm481 = vcmp.eq.f32.partialorder %v480, 8.507059e+37
    %v482 = vand.u32 %v470, 2147483648
    %v483 = vor.u32 1.1754944e-38, %v482
    %v484 = vsel %vm481, %v483, %v479
    %v485 = vmul.f32 1.0, %v484
    %v486 = vadd.f32 %v461, %v173
    %v488 = vrot.slane %v486, 4
    %489 = vrot.lane.b32.xlu0 %v488, 64
    %v490 = vpop.permute.xlu0 %489
    %v492 = vmul.f32 %v485, %v490
    %494 = vrot.lane.b32.xlu0 %v492, 64
    %v495 = vpop.permute.xlu0 %494
    %v497 = vadd.f32 %v361, %v495
    %v498 = vtanh.pop %v497
    %v499 = vsub.f32 1.0, %v485
    %501 = vrot.lane.b32.xlu0 %v498, 96
    %v502 = vpop.permute.xlu0 %501
    %v504 = vmul.f32 %v499, %v502
    %v505 = vmul.f32 %v485, %v351
    %v506 = vadd.f32 %v504, %v505
    %v507 = vsel %vm434, %v506, %v351
    %v508 = vsel %vm434, %v506, 0.0
    %v509 = vsel %vm197, %v436, %v508
    %511 = vrot.lane.b32.xlu0 %v509, 96
    %v512 = vpop.permute.xlu0 %511
    %s514 = scalar_lea.vmem [#allocation5], 16
    %515 = vst.msk [vmem:[%s514] sm:$0xff] %vm52, %v512
    %s516 = scalar_lea.vmem %s0, 24
    %v517 = vld [vmem:[%s516] sm:$0xff]
    %s518 = scalar_lea.vmem %s1, 24
    %v519 = vld [vmem:[%s518] sm:$0xff]
    %vm520 = vcmp.gt.f32.partialorder %v519, 0.0
    %522 = vrot.lane.b32.xlu0 %v435, 96
    %v523 = vpop.permute.xlu0 %522
    %v524 = vsel %vm52, %v523, 0
    %526 = vmatpush.msra.mxu0 0.0
    %527 = vmatpush.msra.mxu0 0.0
    %528 = vmatpush.msra.mxu0 0.0
    %529 = vmatpush.msra.mxu0 0.0
    %530 = vmatpush.msra.mxu0 0.0
    %531 = vmatpush.msra.mxu0 0.0
    %532 = vmatpush.msra.mxu0 0.0
    %533 = vmatpush.msra.mxu0 0.0
    %534 = vmatpush.msra.mxu0 0.0
    %535 = vmatpush.msra.mxu0 0.0
    %536 = vmatpush.msra.mxu0 0.0
    %537 = vmatpush.msra.mxu0 0.0
    %538 = vmatpush.msra.mxu0 %v40
    %539 = vmatpush.msra.mxu0 %v39
    %540 = vmatpush.msra.mxu0 %v38
    %541 = vmatpush.msra.mxu0 %v37
    %542 = vmatmul.f32.gmra.mxu0 %v524
    %v543 = vpop.f32.mrf.mxu0
    %v544 = vadd.f32 0.0, %v543
    %545 = vdwg.mxu0
    %v546 = vadd.f32 %v517, %v544
    %v547 = vxor.u32 %v546, 2147483648
    %v548 = vmul.f32 %v547, 1.442695
    %v549 = vpow.pop %v548
    %v550 = vadd.f32 %v549, 1.0
    %v551 = vrcp.pop %v550
    %v552 = vmul.f32 %v550, %v551
    %v553 = vsub.f32 1.0, %v552
    %v554 = vmul.f32 %v551, %v553
    %v555 = vadd.f32 %v551, %v554
    %vm556 = vweird.f32 %v550
    %vm557 = vweird.f32 %v551
    %vm558 = vmor %vm556, %vm557
    %v559 = vsel %vm558, %v551, %v555
    %v560 = vand.u32 2147483647, %v550
    %vm561 = vcmp.eq.f32.partialorder %v560, 8.507059e+37
    %v562 = vand.u32 %v550, 2147483648
    %v563 = vor.u32 1.1754944e-38, %v562
    %v564 = vsel %vm561, %v563, %v559
    %v565 = vmul.f32 1.0, %v564
    %v566 = vadd.f32 %v544, %v99
    %568 = vrot.lane.b32.xlu0 %v566, 64
    %v569 = vpop.permute.xlu0 %568
    %v571 = vmul.f32 %v565, %v569
    %573 = vrot.lane.b32.xlu0 %v571, 64
    %v574 = vpop.permute.xlu0 %573
    %v576 = vadd.f32 %v517, %v574
    %v577 = vtanh.pop %v576
    %v578 = vsub.f32 1.0, %v565
    %580 = vrot.lane.b32.xlu0 %v577, 96
    %v581 = vpop.permute.xlu0 %580
    %v583 = vmul.f32 %v578, %v581
    %v584 = vmul.f32 %v565, %v435
    %v585 = vadd.f32 %v583, %v584
    %v586 = vsel %vm520, 1, 0
    %587 = vset.pattern.permute.xlu0 0
    %588 = vperm.xlu0 %587, %v586
    %v589 = vpop.permute.xlu0 %588
    %vm590 = vcmp.eq.s32.totalorder %v589, 1
    %v591 = vsel %vm590, %v585, %v435
    %v592 = vsel %vm590, %v585, 0.0
    %v594 = vrot.slane %v507, 4
    %595 = vrot.lane.b32.xlu0 %v594, 96
    %v596 = vpop.permute.xlu0 %595
    %v597 = vsel %vm52, %v596, 0
    %599 = vmatpush.msra.mxu0 0.0
    %600 = vmatpush.msra.mxu0 0.0
    %601 = vmatpush.msra.mxu0 0.0
    %602 = vmatpush.msra.mxu0 0.0
    %603 = vmatpush.msra.mxu0 0.0
    %604 = vmatpush.msra.mxu0 0.0
    %605 = vmatpush.msra.mxu0 0.0
    %606 = vmatpush.msra.mxu0 0.0
    %607 = vmatpush.msra.mxu0 0.0
    %608 = vmatpush.msra.mxu0 0.0
    %609 = vmatpush.msra.mxu0 0.0
    %610 = vmatpush.msra.mxu0 0.0
    %611 = vmatpush.msra.mxu0 %v45
    %612 = vmatpush.msra.mxu0 %v44
    %613 = vmatpush.msra.mxu0 %v43
    %614 = vmatpush.msra.mxu0 %v42
    %615 = vmatmul.f32.gmra.mxu0 %v597
    %v616 = vpop.f32.mrf.mxu0
    %v617 = vadd.f32 0.0, %v616
    %618 = vdwg.mxu0
    %v620 = vrot.slane %v617, 4
    %v622 = vadd.f32 %v517, %v620
    %v623 = vxor.u32 %v622, 2147483648
    %v624 = vmul.f32 %v623, 1.442695
    %v625 = vpow.pop %v624
    %v626 = vadd.f32 %v625, 1.0
    %v627 = vrcp.pop %v626
    %v628 = vmul.f32 %v626, %v627
    %v629 = vsub.f32 1.0, %v628
    %v630 = vmul.f32 %v627, %v629
    %v631 = vadd.f32 %v627, %v630
    %vm632 = vweird.f32 %v626
    %vm633 = vweird.f32 %v627
    %vm634 = vmor %vm632, %vm633
    %v635 = vsel %vm634, %v627, %v631
    %v636 = vand.u32 2147483647, %v626
    %vm637 = vcmp.eq.f32.partialorder %v636, 8.507059e+37
    %v638 = vand.u32 %v626, 2147483648
    %v639 = vor.u32 1.1754944e-38, %v638
    %v640 = vsel %vm637, %v639, %v635
    %v641 = vmul.f32 1.0, %v640
    %v642 = vadd.f32 %v617, %v173
    %v644 = vrot.slane %v642, 4
    %645 = vrot.lane.b32.xlu0 %v644, 64
    %v646 = vpop.permute.xlu0 %645
    %v648 = vmul.f32 %v641, %v646
    %650 = vrot.lane.b32.xlu0 %v648, 64
    %v651 = vpop.permute.xlu0 %650
    %v653 = vadd.f32 %v517, %v651
    %v654 = vtanh.pop %v653
    %v655 = vsub.f32 1.0, %v641
    %657 = vrot.lane.b32.xlu0 %v654, 96
    %v658 = vpop.permute.xlu0 %657
    %v660 = vmul.f32 %v655, %v658
    %v661 = vmul.f32 %v641, %v507
    %v662 = vadd.f32 %v660, %v661
    %v663 = vsel %vm590, %v662, %v507
    %v664 = vsel %vm590, %v662, 0.0
    %v665 = vsel %vm197, %v592, %v664
    %667 = vrot.lane.b32.xlu0 %v665, 96
    %v668 = vpop.permute.xlu0 %667
    %s670 = scalar_lea.vmem [#allocation5], 24
    %671 = vst.msk [vmem:[%s670] sm:$0xff] %vm52, %v668
    %s672 = scalar_lea.vmem %s0, 32
    %v673 = vld [vmem:[%s672] sm:$0xff]
    %s674 = scalar_lea.vmem %s1, 32
    %v675 = vld [vmem:[%s674] sm:$0xff]
    %vm676 = vcmp.gt.f32.partialorder %v675, 0.0
    %678 = vrot.lane.b32.xlu0 %v591, 96
    %v679 = vpop.permute.xlu0 %678
    %v680 = vsel %vm52, %v679, 0
    %682 = vmatpush.msra.mxu0 0.0
    %683 = vmatpush.msra.mxu0 0.0
    %684 = vmatpush.msra.mxu0 0.0
    %685 = vmatpush.msra.mxu0 0.0
    %686 = vmatpush.msra.mxu0 0.0
    %687 = vmatpush.msra.mxu0 0.0
    %688 = vmatpush.msra.mxu0 0.0
    %689 = vmatpush.msra.mxu0 0.0
    %690 = vmatpush.msra.mxu0 0.0
    %691 = vmatpush.msra.mxu0 0.0
    %692 = vmatpush.msra.mxu0 0.0
    %693 = vmatpush.msra.mxu0 0.0
    %694 = vmatpush.msra.mxu0 %v40
    %695 = vmatpush.msra.mxu0 %v39
    %696 = vmatpush.msra.mxu0 %v38
    %697 = vmatpush.msra.mxu0 %v37
    %698 = vmatmul.f32.gmra.mxu0 %v680
    %v699 = vpop.f32.mrf.mxu0
    %v700 = vadd.f32 0.0, %v699
    %701 = vdwg.mxu0
    %v702 = vadd.f32 %v673, %v700
    %v703 = vxor.u32 %v702, 2147483648
    %v704 = vmul.f32 %v703, 1.442695
    %v705 = vpow.pop %v704
    %v706 = vadd.f32 %v705, 1.0
    %v707 = vrcp.pop %v706
    %v708 = vmul.f32 %v706, %v707
    %v709 = vsub.f32 1.0, %v708
    %v710 = vmul.f32 %v707, %v709
    %v711 = vadd.f32 %v707, %v710
    %vm712 = vweird.f32 %v706
    %vm713 = vweird.f32 %v707
    %vm714 = vmor %vm712, %vm713
    %v715 = vsel %vm714, %v707, %v711
    %v716 = vand.u32 2147483647, %v706
    %vm717 = vcmp.eq.f32.partialorder %v716, 8.507059e+37
    %v718 = vand.u32 %v706, 2147483648
    %v719 = vor.u32 1.1754944e-38, %v718
    %v720 = vsel %vm717, %v719, %v715
    %v721 = vmul.f32 1.0, %v720
    %v722 = vadd.f32 %v700, %v99
    %724 = vrot.lane.b32.xlu0 %v722, 64
    %v725 = vpop.permute.xlu0 %724
    %v727 = vmul.f32 %v721, %v725
    %729 = vrot.lane.b32.xlu0 %v727, 64
    %v730 = vpop.permute.xlu0 %729
    %v732 = vadd.f32 %v673, %v730
    %v733 = vtanh.pop %v732
    %v734 = vsub.f32 1.0, %v721
    %736 = vrot.lane.b32.xlu0 %v733, 96
    %v737 = vpop.permute.xlu0 %736
    %v739 = vmul.f32 %v734, %v737
    %v740 = vmul.f32 %v721, %v591
    %v741 = vadd.f32 %v739, %v740
    %v742 = vsel %vm676, 1, 0
    %743 = vset.pattern.permute.xlu0 0
    %744 = vperm.xlu0 %743, %v742
    %v745 = vpop.permute.xlu0 %744
    %vm746 = vcmp.eq.s32.totalorder %v745, 1
    %v747 = vsel %vm746, %v741, %v591
    %v748 = vsel %vm746, %v741, 0.0
    %v750 = vrot.slane %v663, 4
    %751 = vrot.lane.b32.xlu0 %v750, 96
    %v752 = vpop.permute.xlu0 %751
    %v753 = vsel %vm52, %v752, 0
    %755 = vmatpush.msra.mxu0 0.0
    %756 = vmatpush.msra.mxu0 0.0
    %757 = vmatpush.msra.mxu0 0.0
    %758 = vmatpush.msra.mxu0 0.0
    %759 = vmatpush.msra.mxu0 0.0
    %760 = vmatpush.msra.mxu0 0.0
    %761 = vmatpush.msra.mxu0 0.0
    %762 = vmatpush.msra.mxu0 0.0
    %763 = vmatpush.msra.mxu0 0.0
    %764 = vmatpush.msra.mxu0 0.0
    %765 = vmatpush.msra.mxu0 0.0
    %766 = vmatpush.msra.mxu0 0.0
    %767 = vmatpush.msra.mxu0 %v45
    %768 = vmatpush.msra.mxu0 %v44
    %769 = vmatpush.msra.mxu0 %v43
    %770 = vmatpush.msra.mxu0 %v42
    %771 = vmatmul.f32.gmra.mxu0 %v753
    %v772 = vpop.f32.mrf.mxu0
    %v773 = vadd.f32 0.0, %v772
    %774 = vdwg.mxu0
    %v776 = vrot.slane %v773, 4
    %v778 = vadd.f32 %v673, %v776
    %v779 = vxor.u32 %v778, 2147483648
    %v780 = vmul.f32 %v779, 1.442695
    %v781 = vpow.pop %v780
    %v782 = vadd.f32 %v781, 1.0
    %v783 = vrcp.pop %v782
    %v784 = vmul.f32 %v782, %v783
    %v785 = vsub.f32 1.0, %v784
    %v786 = vmul.f32 %v783, %v785
    %v787 = vadd.f32 %v783, %v786
    %vm788 = vweird.f32 %v782
    %vm789 = vweird.f32 %v783
    %vm790 = vmor %vm788, %vm789
    %v791 = vsel %vm790, %v783, %v787
    %v792 = vand.u32 2147483647, %v782
    %vm793 = vcmp.eq.f32.partialorder %v792, 8.507059e+37
    %v794 = vand.u32 %v782, 2147483648
    %v795 = vor.u32 1.1754944e-38, %v794
    %v796 = vsel %vm793, %v795, %v791
    %v797 = vmul.f32 1.0, %v796
    %v798 = vadd.f32 %v773, %v173
    %v800 = vrot.slane %v798, 4
    %801 = vrot.lane.b32.xlu0 %v800, 64
    %v802 = vpop.permute.xlu0 %801
    %v804 = vmul.f32 %v797, %v802
    %806 = vrot.lane.b32.xlu0 %v804, 64
    %v807 = vpop.permute.xlu0 %806
    %v809 = vadd.f32 %v673, %v807
    %v810 = vtanh.pop %v809
    %v811 = vsub.f32 1.0, %v797
    %813 = vrot.lane.b32.xlu0 %v810, 96
    %v814 = vpop.permute.xlu0 %813
    %v816 = vmul.f32 %v811, %v814
    %v817 = vmul.f32 %v797, %v663
    %v818 = vadd.f32 %v816, %v817
    %v819 = vsel %vm746, %v818, %v663
    %v820 = vsel %vm746, %v818, 0.0
    %v821 = vsel %vm197, %v748, %v820
    %823 = vrot.lane.b32.xlu0 %v821, 96
    %v824 = vpop.permute.xlu0 %823
    %s826 = scalar_lea.vmem [#allocation5], 32
    %827 = vst.msk [vmem:[%s826] sm:$0xff] %vm52, %v824
    %s828 = scalar_lea.vmem %s0, 40
    %v829 = vld [vmem:[%s828] sm:$0xff]
    %s830 = scalar_lea.vmem %s1, 40
    %v831 = vld [vmem:[%s830] sm:$0xff]
    %vm832 = vcmp.gt.f32.partialorder %v831, 0.0
    %834 = vrot.lane.b32.xlu0 %v747, 96
    %v835 = vpop.permute.xlu0 %834
    %v836 = vsel %vm52, %v835, 0
    %838 = vmatpush.msra.mxu0 0.0
    %839 = vmatpush.msra.mxu0 0.0
    %840 = vmatpush.msra.mxu0 0.0
    %841 = vmatpush.msra.mxu0 0.0
    %842 = vmatpush.msra.mxu0 0.0
    %843 = vmatpush.msra.mxu0 0.0
    %844 = vmatpush.msra.mxu0 0.0
    %845 = vmatpush.msra.mxu0 0.0
    %846 = vmatpush.msra.mxu0 0.0
    %847 = vmatpush.msra.mxu0 0.0
    %848 = vmatpush.msra.mxu0 0.0
    %849 = vmatpush.msra.mxu0 0.0
    %850 = vmatpush.msra.mxu0 %v40
    %851 = vmatpush.msra.mxu0 %v39
    %852 = vmatpush.msra.mxu0 %v38
    %853 = vmatpush.msra.mxu0 %v37
    %854 = vmatmul.f32.gmra.mxu0 %v836
    %v855 = vpop.f32.mrf.mxu0
    %v856 = vadd.f32 0.0, %v855
    %857 = vdwg.mxu0
    %v858 = vadd.f32 %v829, %v856
    %v859 = vxor.u32 %v858, 2147483648
    %v860 = vmul.f32 %v859, 1.442695
    %v861 = vpow.pop %v860
    %v862 = vadd.f32 %v861, 1.0
    %v863 = vrcp.pop %v862
    %v864 = vmul.f32 %v862, %v863
    %v865 = vsub.f32 1.0, %v864
    %v866 = vmul.f32 %v863, %v865
    %v867 = vadd.f32 %v863, %v866
    %vm868 = vweird.f32 %v862
    %vm869 = vweird.f32 %v863
    %vm870 = vmor %vm868, %vm869
    %v871 = vsel %vm870, %v863, %v867
    %v872 = vand.u32 2147483647, %v862
    %vm873 = vcmp.eq.f32.partialorder %v872, 8.507059e+37
    %v874 = vand.u32 %v862, 2147483648
    %v875 = vor.u32 1.1754944e-38, %v874
    %v876 = vsel %vm873, %v875, %v871
    %v877 = vmul.f32 1.0, %v876
    %v878 = vadd.f32 %v856, %v99
    %880 = vrot.lane.b32.xlu0 %v878, 64
    %v881 = vpop.permute.xlu0 %880
    %v883 = vmul.f32 %v877, %v881
    %885 = vrot.lane.b32.xlu0 %v883, 64
    %v886 = vpop.permute.xlu0 %885
    %v888 = vadd.f32 %v829, %v886
    %v889 = vtanh.pop %v888
    %v890 = vsub.f32 1.0, %v877
    %892 = vrot.lane.b32.xlu0 %v889, 96
    %v893 = vpop.permute.xlu0 %892
    %v895 = vmul.f32 %v890, %v893
    %v896 = vmul.f32 %v877, %v747
    %v897 = vadd.f32 %v895, %v896
    %v898 = vsel %vm832, 1, 0
    %899 = vset.pattern.permute.xlu0 0
    %900 = vperm.xlu0 %899, %v898
    %v901 = vpop.permute.xlu0 %900
    %vm902 = vcmp.eq.s32.totalorder %v901, 1
    %v903 = vsel %vm902, %v897, %v747
    %v904 = vsel %vm902, %v897, 0.0
    %v906 = vrot.slane %v819, 4
    %907 = vrot.lane.b32.xlu0 %v906, 96
    %v908 = vpop.permute.xlu0 %907
    %v909 = vsel %vm52, %v908, 0
    %911 = vmatpush.msra.mxu0 0.0
    %912 = vmatpush.msra.mxu0 0.0
    %913 = vmatpush.msra.mxu0 0.0
    %914 = vmatpush.msra.mxu0 0.0
    %915 = vmatpush.msra.mxu0 0.0
    %916 = vmatpush.msra.mxu0 0.0
    %917 = vmatpush.msra.mxu0 0.0
    %918 = vmatpush.msra.mxu0 0.0
    %919 = vmatpush.msra.mxu0 0.0
    %920 = vmatpush.msra.mxu0 0.0
    %921 = vmatpush.msra.mxu0 0.0
    %922 = vmatpush.msra.mxu0 0.0
    %923 = vmatpush.msra.mxu0 %v45
    %924 = vmatpush.msra.mxu0 %v44
    %925 = vmatpush.msra.mxu0 %v43
    %926 = vmatpush.msra.mxu0 %v42
    %927 = vmatmul.f32.gmra.mxu0 %v909
    %v928 = vpop.f32.mrf.mxu0
    %v929 = vadd.f32 0.0, %v928
    %930 = vdwg.mxu0
    %v932 = vrot.slane %v929, 4
    %v934 = vadd.f32 %v829, %v932
    %v935 = vxor.u32 %v934, 2147483648
    %v936 = vmul.f32 %v935, 1.442695
    %v937 = vpow.pop %v936
    %v938 = vadd.f32 %v937, 1.0
    %v939 = vrcp.pop %v938
    %v940 = vmul.f32 %v938, %v939
    %v941 = vsub.f32 1.0, %v940
    %v942 = vmul.f32 %v939, %v941
    %v943 = vadd.f32 %v939, %v942
    %vm944 = vweird.f32 %v938
    %vm945 = vweird.f32 %v939
    %vm946 = vmor %vm944, %vm945
    %v947 = vsel %vm946, %v939, %v943
    %v948 = vand.u32 2147483647, %v938
    %vm949 = vcmp.eq.f32.partialorder %v948, 8.507059e+37
    %v950 = vand.u32 %v938, 2147483648
    %v951 = vor.u32 1.1754944e-38, %v950
    %v952 = vsel %vm949, %v951, %v947
    %v953 = vmul.f32 1.0, %v952
    %v954 = vadd.f32 %v929, %v173
    %v956 = vrot.slane %v954, 4
    %957 = vrot.lane.b32.xlu0 %v956, 64
    %v958 = vpop.permute.xlu0 %957
    %v960 = vmul.f32 %v953, %v958
    %962 = vrot.lane.b32.xlu0 %v960, 64
    %v963 = vpop.permute.xlu0 %962
    %v965 = vadd.f32 %v829, %v963
    %v966 = vtanh.pop %v965
    %v967 = vsub.f32 1.0, %v953
    %969 = vrot.lane.b32.xlu0 %v966, 96
    %v970 = vpop.permute.xlu0 %969
    %v972 = vmul.f32 %v967, %v970
    %v973 = vmul.f32 %v953, %v819
    %v974 = vadd.f32 %v972, %v973
    %v975 = vsel %vm902, %v974, %v819
    %v976 = vsel %vm902, %v974, 0.0
    %v977 = vsel %vm197, %v904, %v976
    %979 = vrot.lane.b32.xlu0 %v977, 96
    %v980 = vpop.permute.xlu0 %979
    %s982 = scalar_lea.vmem [#allocation5], 40
    %983 = vst.msk [vmem:[%s982] sm:$0xff] %vm52, %v980
    %s984 = scalar_lea.vmem %s0, 48
    %v985 = vld [vmem:[%s984] sm:$0xff]
    %s986 = scalar_lea.vmem %s1, 48
    %v987 = vld [vmem:[%s986] sm:$0xff]
    %vm988 = vcmp.gt.f32.partialorder %v987, 0.0
    %990 = vrot.lane.b32.xlu0 %v903, 96
    %v991 = vpop.permute.xlu0 %990
    %v992 = vsel %vm52, %v991, 0
    %994 = vmatpush.msra.mxu0 0.0
    %995 = vmatpush.msra.mxu0 0.0
    %996 = vmatpush.msra.mxu0 0.0
    %997 = vmatpush.msra.mxu0 0.0
    %998 = vmatpush.msra.mxu0 0.0
    %999 = vmatpush.msra.mxu0 0.0
    %1000 = vmatpush.msra.mxu0 0.0
    %1001 = vmatpush.msra.mxu0 0.0
    %1002 = vmatpush.msra.mxu0 0.0
    %1003 = vmatpush.msra.mxu0 0.0
    %1004 = vmatpush.msra.mxu0 0.0
    %1005 = vmatpush.msra.mxu0 0.0
    %1006 = vmatpush.msra.mxu0 %v40
    %1007 = vmatpush.msra.mxu0 %v39
    %1008 = vmatpush.msra.mxu0 %v38
    %1009 = vmatpush.msra.mxu0 %v37
    %1010 = vmatmul.f32.gmra.mxu0 %v992
    %v1011 = vpop.f32.mrf.mxu0
    %v1012 = vadd.f32 0.0, %v1011
    %1013 = vdwg.mxu0
    %v1014 = vadd.f32 %v985, %v1012
    %v1015 = vxor.u32 %v1014, 2147483648
    %v1016 = vmul.f32 %v1015, 1.442695
    %v1017 = vpow.pop %v1016
    %v1018 = vadd.f32 %v1017, 1.0
    %v1019 = vrcp.pop %v1018
    %v1020 = vmul.f32 %v1018, %v1019
    %v1021 = vsub.f32 1.0, %v1020
    %v1022 = vmul.f32 %v1019, %v1021
    %v1023 = vadd.f32 %v1019, %v1022
    %vm1024 = vweird.f32 %v1018
    %vm1025 = vweird.f32 %v1019
    %vm1026 = vmor %vm1024, %vm1025
    %v1027 = vsel %vm1026, %v1019, %v1023
    %v1028 = vand.u32 2147483647, %v1018
    %vm1029 = vcmp.eq.f32.partialorder %v1028, 8.507059e+37
    %v1030 = vand.u32 %v1018, 2147483648
    %v1031 = vor.u32 1.1754944e-38, %v1030
    %v1032 = vsel %vm1029, %v1031, %v1027
    %v1033 = vmul.f32 1.0, %v1032
    %v1034 = vadd.f32 %v1012, %v99
    %1036 = vrot.lane.b32.xlu0 %v1034, 64
    %v1037 = vpop.permute.xlu0 %1036
    %v1039 = vmul.f32 %v1033, %v1037
    %1041 = vrot.lane.b32.xlu0 %v1039, 64
    %v1042 = vpop.permute.xlu0 %1041
    %v1044 = vadd.f32 %v985, %v1042
    %v1045 = vtanh.pop %v1044
    %v1046 = vsub.f32 1.0, %v1033
    %1048 = vrot.lane.b32.xlu0 %v1045, 96
    %v1049 = vpop.permute.xlu0 %1048
    %v1051 = vmul.f32 %v1046, %v1049
    %v1052 = vmul.f32 %v1033, %v903
    %v1053 = vadd.f32 %v1051, %v1052
    %v1054 = vsel %vm988, 1, 0
    %1055 = vset.pattern.permute.xlu0 0
    %1056 = vperm.xlu0 %1055, %v1054
    %v1057 = vpop.permute.xlu0 %1056
    %vm1058 = vcmp.eq.s32.totalorder %v1057, 1
    %v1059 = vsel %vm1058, %v1053, %v903
    %v1060 = vsel %vm1058, %v1053, 0.0
    %v1062 = vrot.slane %v975, 4
    %1063 = vrot.lane.b32.xlu0 %v1062, 96
    %v1064 = vpop.permute.xlu0 %1063
    %v1065 = vsel %vm52, %v1064, 0
    %1067 = vmatpush.msra.mxu0 0.0
    %1068 = vmatpush.msra.mxu0 0.0
    %1069 = vmatpush.msra.mxu0 0.0
    %1070 = vmatpush.msra.mxu0 0.0
    %1071 = vmatpush.msra.mxu0 0.0
    %1072 = vmatpush.msra.mxu0 0.0
    %1073 = vmatpush.msra.mxu0 0.0
    %1074 = vmatpush.msra.mxu0 0.0
    %1075 = vmatpush.msra.mxu0 0.0
    %1076 = vmatpush.msra.mxu0 0.0
    %1077 = vmatpush.msra.mxu0 0.0
    %1078 = vmatpush.msra.mxu0 0.0
    %1079 = vmatpush.msra.mxu0 %v45
    %1080 = vmatpush.msra.mxu0 %v44
    %1081 = vmatpush.msra.mxu0 %v43
    %1082 = vmatpush.msra.mxu0 %v42
    %1083 = vmatmul.f32.gmra.mxu0 %v1065
    %v1084 = vpop.f32.mrf.mxu0
    %v1085 = vadd.f32 0.0, %v1084
    %1086 = vdwg.mxu0
    %v1088 = vrot.slane %v1085, 4
    %v1090 = vadd.f32 %v985, %v1088
    %v1091 = vxor.u32 %v1090, 2147483648
    %v1092 = vmul.f32 %v1091, 1.442695
    %v1093 = vpow.pop %v1092
    %v1094 = vadd.f32 %v1093, 1.0
    %v1095 = vrcp.pop %v1094
    %v1096 = vmul.f32 %v1094, %v1095
    %v1097 = vsub.f32 1.0, %v1096
    %v1098 = vmul.f32 %v1095, %v1097
    %v1099 = vadd.f32 %v1095, %v1098
    %vm1100 = vweird.f32 %v1094
    %vm1101 = vweird.f32 %v1095
    %vm1102 = vmor %vm1100, %vm1101
    %v1103 = vsel %vm1102, %v1095, %v1099
    %v1104 = vand.u32 2147483647, %v1094
    %vm1105 = vcmp.eq.f32.partialorder %v1104, 8.507059e+37
    %v1106 = vand.u32 %v1094, 2147483648
    %v1107 = vor.u32 1.1754944e-38, %v1106
    %v1108 = vsel %vm1105, %v1107, %v1103
    %v1109 = vmul.f32 1.0, %v1108
    %v1110 = vadd.f32 %v1085, %v173
    %v1112 = vrot.slane %v1110, 4
    %1113 = vrot.lane.b32.xlu0 %v1112, 64
    %v1114 = vpop.permute.xlu0 %1113
    %v1116 = vmul.f32 %v1109, %v1114
    %1118 = vrot.lane.b32.xlu0 %v1116, 64
    %v1119 = vpop.permute.xlu0 %1118
    %v1121 = vadd.f32 %v985, %v1119
    %v1122 = vtanh.pop %v1121
    %v1123 = vsub.f32 1.0, %v1109
    %1125 = vrot.lane.b32.xlu0 %v1122, 96
    %v1126 = vpop.permute.xlu0 %1125
    %v1128 = vmul.f32 %v1123, %v1126
    %v1129 = vmul.f32 %v1109, %v975
    %v1130 = vadd.f32 %v1128, %v1129
    %v1131 = vsel %vm1058, %v1130, %v975
    %v1132 = vsel %vm1058, %v1130, 0.0
    %v1133 = vsel %vm197, %v1060, %v1132
    %1135 = vrot.lane.b32.xlu0 %v1133, 96
    %v1136 = vpop.permute.xlu0 %1135
    %s1138 = scalar_lea.vmem [#allocation5], 48
    %1139 = vst.msk [vmem:[%s1138] sm:$0xff] %vm52, %v1136
    %s1140 = scalar_lea.vmem %s0, 56
    %v1141 = vld [vmem:[%s1140] sm:$0xff]
    %s1142 = scalar_lea.vmem %s1, 56
    %v1143 = vld [vmem:[%s1142] sm:$0xff]
    %vm1144 = vcmp.gt.f32.partialorder %v1143, 0.0
    %1146 = vrot.lane.b32.xlu0 %v1059, 96
    %v1147 = vpop.permute.xlu0 %1146
    %v1148 = vsel %vm52, %v1147, 0
    %1150 = vmatpush.msra.mxu0 0.0
    %1151 = vmatpush.msra.mxu0 0.0
    %1152 = vmatpush.msra.mxu0 0.0
    %1153 = vmatpush.msra.mxu0 0.0
    %1154 = vmatpush.msra.mxu0 0.0
    %1155 = vmatpush.msra.mxu0 0.0
    %1156 = vmatpush.msra.mxu0 0.0
    %1157 = vmatpush.msra.mxu0 0.0
    %1158 = vmatpush.msra.mxu0 0.0
    %1159 = vmatpush.msra.mxu0 0.0
    %1160 = vmatpush.msra.mxu0 0.0
    %1161 = vmatpush.msra.mxu0 0.0
    %1162 = vmatpush.msra.mxu0 %v40
    %1163 = vmatpush.msra.mxu0 %v39
    %1164 = vmatpush.msra.mxu0 %v38
    %1165 = vmatpush.msra.mxu0 %v37
    %1166 = vmatmul.f32.gmra.mxu0 %v1148
    %v1167 = vpop.f32.mrf.mxu0
    %v1168 = vadd.f32 0.0, %v1167
    %1169 = vdwg.mxu0
    %v1170 = vadd.f32 %v1141, %v1168
    %v1171 = vxor.u32 %v1170, 2147483648
    %v1172 = vmul.f32 %v1171, 1.442695
    %v1173 = vpow.pop %v1172
    %v1174 = vadd.f32 %v1173, 1.0
    %v1175 = vrcp.pop %v1174
    %v1176 = vmul.f32 %v1174, %v1175
    %v1177 = vsub.f32 1.0, %v1176
    %v1178 = vmul.f32 %v1175, %v1177
    %v1179 = vadd.f32 %v1175, %v1178
    %vm1180 = vweird.f32 %v1174
    %vm1181 = vweird.f32 %v1175
    %vm1182 = vmor %vm1180, %vm1181
    %v1183 = vsel %vm1182, %v1175, %v1179
    %v1184 = vand.u32 2147483647, %v1174
    %vm1185 = vcmp.eq.f32.partialorder %v1184, 8.507059e+37
    %v1186 = vand.u32 %v1174, 2147483648
    %v1187 = vor.u32 1.1754944e-38, %v1186
    %v1188 = vsel %vm1185, %v1187, %v1183
    %v1189 = vmul.f32 1.0, %v1188
    %v1190 = vadd.f32 %v1168, %v99
    %1192 = vrot.lane.b32.xlu0 %v1190, 64
    %v1193 = vpop.permute.xlu0 %1192
    %v1195 = vmul.f32 %v1189, %v1193
    %1197 = vrot.lane.b32.xlu0 %v1195, 64
    %v1198 = vpop.permute.xlu0 %1197
    %v1200 = vadd.f32 %v1141, %v1198
    %v1201 = vtanh.pop %v1200
    %v1202 = vsub.f32 1.0, %v1189
    %1204 = vrot.lane.b32.xlu0 %v1201, 96
    %v1205 = vpop.permute.xlu0 %1204
    %v1207 = vmul.f32 %v1202, %v1205
    %v1208 = vmul.f32 %v1189, %v1059
    %v1209 = vadd.f32 %v1207, %v1208
    %v1210 = vsel %vm1144, 1, 0
    %1211 = vset.pattern.permute.xlu0 0
    %1212 = vperm.xlu0 %1211, %v1210
    %v1213 = vpop.permute.xlu0 %1212
    %vm1214 = vcmp.eq.s32.totalorder %v1213, 1
    %v1215 = vsel %vm1214, %v1209, %v1059
    %v1216 = vsel %vm1214, %v1209, 0.0
    %v1218 = vrot.slane %v1131, 4
    %1219 = vrot.lane.b32.xlu0 %v1218, 96
    %v1220 = vpop.permute.xlu0 %1219
    %v1221 = vsel %vm52, %v1220, 0
    %1223 = vmatpush.msra.mxu0 0.0
    %1224 = vmatpush.msra.mxu0 0.0
    %1225 = vmatpush.msra.mxu0 0.0
    %1226 = vmatpush.msra.mxu0 0.0
    %1227 = vmatpush.msra.mxu0 0.0
    %1228 = vmatpush.msra.mxu0 0.0
    %1229 = vmatpush.msra.mxu0 0.0
    %1230 = vmatpush.msra.mxu0 0.0
    %1231 = vmatpush.msra.mxu0 0.0
    %1232 = vmatpush.msra.mxu0 0.0
    %1233 = vmatpush.msra.mxu0 0.0
    %1234 = vmatpush.msra.mxu0 0.0
    %1235 = vmatpush.msra.mxu0 %v45
    %1236 = vmatpush.msra.mxu0 %v44
    %1237 = vmatpush.msra.mxu0 %v43
    %1238 = vmatpush.msra.mxu0 %v42
    %1239 = vmatmul.f32.gmra.mxu0 %v1221
    %v1240 = vpop.f32.mrf.mxu0
    %v1241 = vadd.f32 0.0, %v1240
    %1242 = vdwg.mxu0
    %v1244 = vrot.slane %v1241, 4
    %v1246 = vadd.f32 %v1141, %v1244
    %v1247 = vxor.u32 %v1246, 2147483648
    %v1248 = vmul.f32 %v1247, 1.442695
    %v1249 = vpow.pop %v1248
    %v1250 = vadd.f32 %v1249, 1.0
    %v1251 = vrcp.pop %v1250
    %v1252 = vmul.f32 %v1250, %v1251
    %v1253 = vsub.f32 1.0, %v1252
    %v1254 = vmul.f32 %v1251, %v1253
    %v1255 = vadd.f32 %v1251, %v1254
    %vm1256 = vweird.f32 %v1250
    %vm1257 = vweird.f32 %v1251
    %vm1258 = vmor %vm1256, %vm1257
    %v1259 = vsel %vm1258, %v1251, %v1255
    %v1260 = vand.u32 2147483647, %v1250
    %vm1261 = vcmp.eq.f32.partialorder %v1260, 8.507059e+37
    %v1262 = vand.u32 %v1250, 2147483648
    %v1263 = vor.u32 1.1754944e-38, %v1262
    %v1264 = vsel %vm1261, %v1263, %v1259
    %v1265 = vmul.f32 1.0, %v1264
    %v1266 = vadd.f32 %v1241, %v173
    %v1268 = vrot.slane %v1266, 4
    %1269 = vrot.lane.b32.xlu0 %v1268, 64
    %v1270 = vpop.permute.xlu0 %1269
    %v1272 = vmul.f32 %v1265, %v1270
    %1274 = vrot.lane.b32.xlu0 %v1272, 64
    %v1275 = vpop.permute.xlu0 %1274
    %v1277 = vadd.f32 %v1141, %v1275
    %v1278 = vtanh.pop %v1277
    %v1279 = vsub.f32 1.0, %v1265
    %1281 = vrot.lane.b32.xlu0 %v1278, 96
    %v1282 = vpop.permute.xlu0 %1281
    %v1284 = vmul.f32 %v1279, %v1282
    %v1285 = vmul.f32 %v1265, %v1131
    %v1286 = vadd.f32 %v1284, %v1285
    %v1287 = vsel %vm1214, %v1286, %v1131
    %v1288 = vsel %vm1214, %v1286, 0.0
    %v1289 = vsel %vm197, %v1216, %v1288
    %1291 = vrot.lane.b32.xlu0 %v1289, 96
    %v1292 = vpop.permute.xlu0 %1291
    %s1294 = scalar_lea.vmem [#allocation5], 56
    %1295 = vst.msk [vmem:[%s1294] sm:$0xff] %vm52, %v1292
    %v1296 = vsel %vm197, %v1215, %v1287
    %1298 = vrot.lane.b32.xlu0 %v1296, 96
    %v1299 = vpop.permute.xlu0 %1298
    %1301 = vst.msk [vmem:[#allocation6] sm:$0xff] %vm52, %v1299
    // Predicated region
    $region22: #{tpu_custom_call.1} parent=1 // pred_check
      _
    $region23: #{tpu_custom_call.1} parent=1 // pred_check_branch
      %1303 = sbr.rel (0) target = $region25
    $region24: #{tpu_custom_call.1} parent=1 // pred_region
      %1305 = vsyncadd [#allocation4], 0
      %s1306 = sshll.u32 [#allocation5], 4
      %s1307 = int_to_ptr.vmem [resolvable:$true] %s1306
      %s1308 = sshll.u32 %s4, 4
      %s1309 = int_to_ptr.hbm [resolvable:$true] %s1308
      %1314 = dma.vmem_to_hbm [thread:$0]  %s1307, 1024, %s1309, [#allocation4], 128, 128, 8
    $region25: #{tpu_custom_call.1} parent=1 // pred_fallthru
      _
    // Predicated region
    $region26: #{tpu_custom_call.1} parent=1 // pred_check
      _
    $region27: #{tpu_custom_call.1} parent=1 // pred_check_branch
      %1316 = sbr.rel (0) target = $region29
    $region28: #{tpu_custom_call.1} parent=1 // pred_region
      %1318 = vsyncadd [#allocation7], 0
      %s1320 = sshll.u32 [#allocation6], 4
      %s1321 = int_to_ptr.vmem [resolvable:$true] %s1320
      %s1322 = sshll.u32 %s5, 4
      %s1323 = int_to_ptr.hbm [resolvable:$true] %s1322
      %1325 = dma.vmem_to_hbm [thread:$0]  %s1321, 128, %s1323, [#allocation7]
    $region29: #{tpu_custom_call.1} parent=1 // pred_fallthru
      _
    // Predicated region
    $region30: #{tpu_custom_call.1} parent=1 // pred_check
      _
    $region31: #{tpu_custom_call.1} parent=1 // pred_check_branch
      %1327 = sbr.rel (0) target = $region33
    $region32: #{tpu_custom_call.1} parent=1 // pred_region
      %1329 = dma.done [#allocation4], 1024
    $region33: #{tpu_custom_call.1} parent=1 // pred_fallthru
      _
    // Predicated region
    $region34: #{tpu_custom_call.1} parent=1 // pred_check
      _
    $region35: #{tpu_custom_call.1} parent=1 // pred_check_branch
      %1331 = sbr.rel (0) target = $region37
    $region36: #{tpu_custom_call.1} parent=1 // pred_region
      %1333 = dma.done [#allocation7], 128
    $region37: #{tpu_custom_call.1} parent=1 // pred_fallthru
      _
    %1334 = vsyncpa [#allocation3], 1
    %1335 = vsyncpa [#allocation4], 1
    %1336 = vsyncpa [#allocation7], 1

</llo_original>
